<compile_context>
chip_gen: v7x
topology: tpu7x:2x2x1
jax: 0.10.0
libtpu: 0.0.40
codegen_flags: <defaults>
</compile_context>

<pallas_src>
import math
import jax
import jax.numpy as jnp
from jax.experimental import pallas as pl
from jax.experimental.pallas import tpu as pltpu


# ----------------------------------------------------------------------------
# Pallas kernel: full TemporalLSTM forward for ONE batch element (grid over B).
# ----------------------------------------------------------------------------
def temporal_lstm_kernel(
    H_ref,      # (1, S, D)   this batch element's input sequence
    y0_ref,     # (1, 1, O)   initial y_{t-1}
    Wa_ref,     # (D, S)
    ba_ref,     # (1, S)
    Va_ref,     # (S, S)
    W_ref,      # (D, 4*HS)   gate-reordered [i,f,o,g]
    UWy_ref,    # (HS+O, 4*HS)  fused [U; Wy], gate-reordered
    b_ref,      # (1, 4*HS)   gate-reordered bias
    fcwT_ref,   # (HS, O)     fc.weight transposed
    fcb_ref,    # (1, O)
    y_out_ref,  # (1, 1, O)   output: final y_t
    hseq_ref,   # (1, S, HS)  output: hidden states, already (B, S, HS) layout
):
    _, S, D = H_ref.shape
    HS = UWy_ref.shape[1] // 4
    O = fcb_ref.shape[1]

    Hb = H_ref[0]                                   # (S, D)

    # ---- temporal attention, hoisted out of the recurrence (s_t == 0 always) ----
    pre = jnp.tanh(
        jnp.dot(Hb, Wa_ref[...], preferred_element_type=jnp.float32) + ba_ref[...]
    )                                               # (S, S)
    logits = jnp.dot(pre, Va_ref[...], preferred_element_type=jnp.float32)  # (S, S)
    logits = logits - jnp.max(logits, axis=-1, keepdims=True)
    e = jnp.exp(logits)
    beta = e * pl.reciprocal(jnp.sum(e, axis=-1, keepdims=True), approx=True)  # (S, S)

    # Attention-weighted context for every step t, and its gate projection + bias.
    h_att = jnp.dot(beta, Hb, preferred_element_type=jnp.float32)           # (S, D)
    xWb = jnp.dot(h_att, W_ref[...], preferred_element_type=jnp.float32) + b_ref[...]  # (S, 4*HS)

    UWy = UWy_ref[...]
    fcwT = fcwT_ref[...]
    fcb = fcb_ref[...]

    h = jnp.zeros((1, HS), jnp.float32)
    c = jnp.zeros((1, HS), jnp.float32)
    y = y0_ref[0]                                   # (1, O)

    # ---- recurrence: fully unrolled (S is a small static trip count) ----
    for t in range(S):
        hy = jnp.concatenate([h, y], axis=1)        # (1, HS+O)
        gates = xWb[t:t + 1, :] + jnp.dot(hy, UWy, preferred_element_type=jnp.float32)

        # gate layout is [i, f, o, g]: one sigmoid over 3*HS lanes + one tanh.
        sig = jax.nn.sigmoid(gates[:, : 3 * HS])
        i_t = sig[:, :HS]
        f_t = sig[:, HS:2 * HS]
        o_t = sig[:, 2 * HS:3 * HS]
        g_t = jnp.tanh(gates[:, 3 * HS:])

        c = f_t * c + i_t * g_t
        h = o_t * jnp.tanh(c)

        hseq_ref[0, t:t + 1, :] = h                 # direct (B,S,HS)-layout store
        y = jnp.dot(h, fcwT, preferred_element_type=jnp.float32) + fcb

    y_out_ref[0] = y


# ----------------------------------------------------------------------------
# Wrapper
# ----------------------------------------------------------------------------
def temporal_lstm(H, y_t_1, params):
    B, S, D = H.shape
    HS = params["U"].shape[0]
    O = params["fc_b"].shape[0]

    def reorder_gates(m):
        # columns [i, f, g, o] -> [i, f, o, g]
        i, f, g, o = jnp.split(m, [HS, 2 * HS, 3 * HS], axis=-1)
        return jnp.concatenate([i, f, o, g], axis=-1)

    W_r = reorder_gates(params["W"])                                   # (D, 4HS)
    UWy = jnp.concatenate(
        [reorder_gates(params["U"]), reorder_gates(params["Wy"])], axis=0
    )                                                                  # (HS+O, 4HS)
    b_r = reorder_gates(params["bias"].reshape(1, 4 * HS))             # (1, 4HS)

    in_specs = [
        pl.BlockSpec((1, S, D), lambda b: (b, 0, 0)),       # H
        pl.BlockSpec((1, 1, O), lambda b: (b, 0, 0)),       # y0
        pl.BlockSpec((D, S), lambda b: (0, 0)),             # Wa
        pl.BlockSpec((1, S), lambda b: (0, 0)),             # ba
        pl.BlockSpec((S, S), lambda b: (0, 0)),             # Va
        pl.BlockSpec((D, 4 * HS), lambda b: (0, 0)),        # W (reordered)
        pl.BlockSpec((HS + O, 4 * HS), lambda b: (0, 0)),   # [U; Wy] fused
        pl.BlockSpec((1, 4 * HS), lambda b: (0, 0)),        # bias (reordered)
        pl.BlockSpec((HS, O), lambda b: (0, 0)),            # fc.weight.T
        pl.BlockSpec((1, O), lambda b: (0, 0)),             # fc.bias
    ]
    out_specs = (
        pl.BlockSpec((1, 1, O), lambda b: (b, 0, 0)),       # y_final
        pl.BlockSpec((1, S, HS), lambda b: (b, 0, 0)),      # hidden_seq (B,S,HS)
    )

    y_final, hidden_seq = pl.pallas_call(
        temporal_lstm_kernel,
        out_shape=(
            jax.ShapeDtypeStruct((B, 1, O), jnp.float32),
            jax.ShapeDtypeStruct((B, S, HS), jnp.float32),
        ),
        grid=(B,),
        in_specs=in_specs,
        out_specs=out_specs,
        compiler_params=pltpu.CompilerParams(dimension_semantics=("parallel",)),
    )(
        H.astype(jnp.float32),
        y_t_1.astype(jnp.float32).reshape(B, 1, O),
        params["Wa"],
        params["ba"].reshape(1, S),
        params["Va"],
        W_r,
        UWy,
        b_r,
        params["fc_w"].T,                 # (HS, O)
        params["fc_b"].reshape(1, O),
    )
    return y_final.reshape(B, O), hidden_seq


# ----------------------------------------------------------------------------
# Pure-JAX reference (mirrors the PyTorch forward) for a correctness check.
# ----------------------------------------------------------------------------
def temporal_lstm_ref(H, y_t_1, p):
    B, S, D = H.shape
    HS = p["U"].shape[0]
    h = jnp.zeros((B, HS), jnp.float32)
    c = jnp.zeros((B, HS), jnp.float32)
    s = jnp.zeros((B, HS), jnp.float32)
    y = y_t_1
    hs = []
    for t in range(S):
        h_t = H[:, t, :]
        pre = jnp.tanh(h_t @ p["Wa"] + s @ p["Ua"] + p["ba"])
        beta = jax.nn.softmax(pre @ p["Va"], axis=1)
        h_att = jnp.sum(beta[:, :, None] * H, axis=1)
        gates = h_att @ p["W"] + h @ p["U"] + y @ p["Wy"] + p["bias"]
        i = jax.nn.sigmoid(gates[:, :HS])
        f = jax.nn.sigmoid(gates[:, HS:2 * HS])
        g = jnp.tanh(gates[:, 2 * HS:3 * HS])
        o = jax.nn.sigmoid(gates[:, 3 * HS:])
        c = f * c + i * g
        h = o * jnp.tanh(c)
        hs.append(h)
        y = h @ p["fc_w"].T + p["fc_b"]
    return y, jnp.stack(hs, axis=1)


# ----------------------------------------------------------------------------
# Deterministic parameter init (uniform(-1/sqrt(HS), 1/sqrt(HS)), as in module)
# ----------------------------------------------------------------------------
def init_params(key, input_dim, hidden_dim, seq_len, output_dim):
    stdv = 1.0 / math.sqrt(hidden_dim)
    shapes = {
        "Wa": (input_dim, seq_len),
        "Ua": (hidden_dim, seq_len),
        "ba": (seq_len,),
        "Va": (seq_len, seq_len),
        "W": (input_dim, hidden_dim * 4),
        "U": (hidden_dim, hidden_dim * 4),
        "bias": (hidden_dim * 4,),
        "Wy": (output_dim, hidden_dim * 4),
        "fc_w": (output_dim, hidden_dim),
        "fc_b": (output_dim,),
    }
    keys = jax.random.split(key, len(shapes))
    return {
        name: jax.random.uniform(k, shp, jnp.float32, minval=-stdv, maxval=stdv)
        for k, (name, shp) in zip(keys, shapes.items())
    }


if __name__ == "__main__":
    B, S, D, HS, O = 2, 8, 4, 32, 4

    key = jax.random.PRNGKey(0)
    kp, kh, ky = jax.random.split(key, 3)
    params = init_params(kp, D, HS, S, O)
    H = jax.random.normal(kh, (B, S, D), jnp.float32)
    y_t_1 = jax.random.normal(ky, (B, O), jnp.float32)

    y_out, hidden_seq = temporal_lstm(H, y_t_1, params)
    y_out = jax.block_until_ready(y_out)
    hidden_seq = jax.block_until_ready(hidden_seq)

    # sanity check against pure-JAX reference
    y_ref, hs_ref = temporal_lstm_ref(H, y_t_1, params)
    assert y_out.shape == (B, O) and hidden_seq.shape == (B, S, HS)
    assert jnp.allclose(y_out, y_ref, rtol=1e-2, atol=1e-2)
    assert jnp.allclose(hidden_seq, hs_ref, rtol=1e-2, atol=1e-2)

    print("KERNEL_OK")
</pallas_src>

<mosaic_0001>
module attributes {stable_mosaic.version = 11 : i64} {
  func.func @temporal_lstm_kernel(%arg0: i32, %arg1: memref<1x8x4xf32, #tpu.memory_space<vmem>>, %arg2: memref<1x1x4xf32, #tpu.memory_space<vmem>>, %arg3: memref<4x8xf32, #tpu.memory_space<vmem>>, %arg4: memref<1x8xf32, #tpu.memory_space<vmem>>, %arg5: memref<8x8xf32, #tpu.memory_space<vmem>>, %arg6: memref<4x128xf32, #tpu.memory_space<vmem>>, %arg7: memref<36x128xf32, #tpu.memory_space<vmem>>, %arg8: memref<1x128xf32, #tpu.memory_space<vmem>>, %arg9: memref<32x4xf32, #tpu.memory_space<vmem>>, %arg10: memref<1x4xf32, #tpu.memory_space<vmem>>, %arg11: memref<1x1x4xf32, #tpu.memory_space<vmem>>, %arg12: memref<1x8x32xf32, #tpu.memory_space<vmem>>) attributes {dimension_semantics = [#tpu.dimension_semantics<parallel>], iteration_bounds = array<i64: 2>, scalar_prefetch = 0 : i64, scratch_operands = 0 : i64, tpu.core_type = #tpu.core_type<tc>, window_params = [{transform_indices = @transform_0, window_bounds = array<i64: 1, 8, 4>}, {transform_indices = @transform_1, window_bounds = array<i64: 1, 1, 4>}, {pipeline_mode = #tpu.pipeline_mode<synchronous>, transform_indices = @transform_2, window_bounds = array<i64: 4, 8>}, {pipeline_mode = #tpu.pipeline_mode<synchronous>, transform_indices = @transform_3, window_bounds = array<i64: 1, 8>}, {pipeline_mode = #tpu.pipeline_mode<synchronous>, transform_indices = @transform_4, window_bounds = array<i64: 8, 8>}, {pipeline_mode = #tpu.pipeline_mode<synchronous>, transform_indices = @transform_5, window_bounds = array<i64: 4, 128>}, {pipeline_mode = #tpu.pipeline_mode<synchronous>, transform_indices = @transform_6, window_bounds = array<i64: 36, 128>}, {pipeline_mode = #tpu.pipeline_mode<synchronous>, transform_indices = @transform_7, window_bounds = array<i64: 1, 128>}, {pipeline_mode = #tpu.pipeline_mode<synchronous>, transform_indices = @transform_8, window_bounds = array<i64: 32, 4>}, {pipeline_mode = #tpu.pipeline_mode<synchronous>, transform_indices = @transform_9, window_bounds = array<i64: 1, 4>}, {transform_indices = @transform_10, window_bounds = array<i64: 1, 1, 4>}, {transform_indices = @transform_11, window_bounds = array<i64: 1, 8, 32>}]} {
    %c0 = arith.constant 0 : index
    %c0_0 = arith.constant 0 : index
    %c0_1 = arith.constant 0 : index
    %0 = vector.load %arg1[%c0, %c0_0, %c0_1] : memref<1x8x4xf32, #tpu.memory_space<vmem>>, vector<1x8x4xf32>
    %1 = vector.shape_cast %0 : vector<1x8x4xf32> to vector<8x4xf32>
    %c0_2 = arith.constant 0 : index
    %c0_3 = arith.constant 0 : index
    %2 = vector.load %arg3[%c0_2, %c0_3] : memref<4x8xf32, #tpu.memory_space<vmem>>, vector<4x8xf32>
    %cst = arith.constant dense<0.000000e+00> : vector<8x8xf32>
    %3 = tpu.matmul %1, %2, %cst {dimension_numbers = #tpu.dot_dimension_numbers<[1], [0], [0], [1], [0, 0, 1, 1], [], []>} : vector<8x4xf32>, vector<4x8xf32>, vector<8x8xf32> -> vector<8x8xf32>
    %c0_4 = arith.constant 0 : index
    %c0_5 = arith.constant 0 : index
    %4 = vector.load %arg4[%c0_4, %c0_5] : memref<1x8xf32, #tpu.memory_space<vmem>>, vector<1x8xf32>
    %5 = vector.broadcast %4 : vector<1x8xf32> to vector<8x8xf32>
    %6 = arith.addf %3, %5 : vector<8x8xf32>
    %7 = math.tanh %6 : vector<8x8xf32>
    %c0_6 = arith.constant 0 : index
    %c0_7 = arith.constant 0 : index
    %8 = vector.load %arg5[%c0_6, %c0_7] : memref<8x8xf32, #tpu.memory_space<vmem>>, vector<8x8xf32>
    %cst_8 = arith.constant dense<0.000000e+00> : vector<8x8xf32>
    %9 = tpu.matmul %7, %8, %cst_8 {dimension_numbers = #tpu.dot_dimension_numbers<[1], [0], [0], [1], [0, 0, 1, 1], [], []>} : vector<8x8xf32>, vector<8x8xf32>, vector<8x8xf32> -> vector<8x8xf32>
    %cst_9 = arith.constant dense<0xFF800000> : vector<8xf32>
    %10 = vector.multi_reduction <maximumf>, %9, %cst_9 [1] : vector<8x8xf32> to vector<8xf32>
    %11 = vector.shape_cast %10 : vector<8xf32> to vector<8x1xf32>
    %12 = vector.broadcast %11 : vector<8x1xf32> to vector<8x8xf32>
    %13 = arith.subf %9, %12 : vector<8x8xf32>
    %14 = math.exp %13 : vector<8x8xf32>
    %cst_10 = arith.constant dense<0.000000e+00> : vector<8xf32>
    %15 = vector.multi_reduction <add>, %14, %cst_10 [1] : vector<8x8xf32> to vector<8xf32>
    %16 = vector.shape_cast %15 : vector<8xf32> to vector<8x1xf32>
    %17 = tpu.reciprocal %16 {approx = true} : vector<8x1xf32> -> vector<8x1xf32>
    %18 = vector.broadcast %17 : vector<8x1xf32> to vector<8x8xf32>
    %19 = arith.mulf %14, %18 : vector<8x8xf32>
    %cst_11 = arith.constant dense<0.000000e+00> : vector<8x4xf32>
    %20 = tpu.matmul %19, %1, %cst_11 {dimension_numbers = #tpu.dot_dimension_numbers<[1], [0], [0], [1], [0, 0, 1, 1], [], []>} : vector<8x8xf32>, vector<8x4xf32>, vector<8x4xf32> -> vector<8x4xf32>
    %c0_12 = arith.constant 0 : index
    %c0_13 = arith.constant 0 : index
    %21 = vector.load %arg6[%c0_12, %c0_13] : memref<4x128xf32, #tpu.memory_space<vmem>>, vector<4x128xf32>
    %cst_14 = arith.constant dense<0.000000e+00> : vector<8x128xf32>
    %22 = tpu.matmul %20, %21, %cst_14 {dimension_numbers = #tpu.dot_dimension_numbers<[1], [0], [0], [1], [0, 0, 1, 1], [], []>} : vector<8x4xf32>, vector<4x128xf32>, vector<8x128xf32> -> vector<8x128xf32>
    %c0_15 = arith.constant 0 : index
    %c0_16 = arith.constant 0 : index
    %23 = vector.load %arg8[%c0_15, %c0_16] : memref<1x128xf32, #tpu.memory_space<vmem>>, vector<1x128xf32>
    %24 = vector.broadcast %23 : vector<1x128xf32> to vector<8x128xf32>
    %25 = arith.addf %22, %24 : vector<8x128xf32>
    %c0_17 = arith.constant 0 : index
    %c0_18 = arith.constant 0 : index
    %26 = vector.load %arg7[%c0_17, %c0_18] : memref<36x128xf32, #tpu.memory_space<vmem>>, vector<36x128xf32>
    %c0_19 = arith.constant 0 : index
    %c0_20 = arith.constant 0 : index
    %27 = vector.load %arg9[%c0_19, %c0_20] : memref<32x4xf32, #tpu.memory_space<vmem>>, vector<32x4xf32>
    %c0_21 = arith.constant 0 : index
    %c0_22 = arith.constant 0 : index
    %28 = vector.load %arg10[%c0_21, %c0_22] : memref<1x4xf32, #tpu.memory_space<vmem>>, vector<1x4xf32>
    %cst_23 = arith.constant 0.000000e+00 : f32
    %29 = vector.broadcast %cst_23 : f32 to vector<1x32xf32>
    %cst_24 = arith.constant 0.000000e+00 : f32
    %30 = vector.broadcast %cst_24 : f32 to vector<1x32xf32>
    %c0_25 = arith.constant 0 : index
    %c0_26 = arith.constant 0 : index
    %c0_27 = arith.constant 0 : index
    %31 = vector.load %arg2[%c0_25, %c0_26, %c0_27] : memref<1x1x4xf32, #tpu.memory_space<vmem>>, vector<1x1x4xf32>
    %32 = vector.shape_cast %31 : vector<1x1x4xf32> to vector<1x4xf32>
    %33 = tpu.concatenate %29, %32 in 1 : vector<1x32xf32>, vector<1x4xf32> -> vector<1x36xf32>
    %34 = vector.extract_strided_slice %25 {offsets = [0, 0], sizes = [1, 128], strides = [1, 1]} : vector<8x128xf32> to vector<1x128xf32>
    %cst_28 = arith.constant dense<0.000000e+00> : vector<1x128xf32>
    %35 = tpu.matmul %33, %26, %cst_28 {dimension_numbers = #tpu.dot_dimension_numbers<[1], [0], [0], [1], [0, 0, 1, 1], [], []>} : vector<1x36xf32>, vector<36x128xf32>, vector<1x128xf32> -> vector<1x128xf32>
    %36 = arith.addf %34, %35 : vector<1x128xf32>
    %37 = vector.extract_strided_slice %36 {offsets = [0, 0], sizes = [1, 96], strides = [1, 1]} : vector<1x128xf32> to vector<1x96xf32>
    %38 = arith.negf %37 : vector<1x96xf32>
    %39 = math.exp %38 : vector<1x96xf32>
    %cst_29 = arith.constant 1.000000e+00 : f32
    %40 = vector.broadcast %cst_29 : f32 to vector<1x96xf32>
    %41 = arith.addf %40, %39 : vector<1x96xf32>
    %42 = arith.divf %40, %41 : vector<1x96xf32>
    %43 = vector.extract_strided_slice %42 {offsets = [0, 0], sizes = [1, 32], strides = [1, 1]} : vector<1x96xf32> to vector<1x32xf32>
    %44 = vector.extract_strided_slice %42 {offsets = [0, 32], sizes = [1, 32], strides = [1, 1]} : vector<1x96xf32> to vector<1x32xf32>
    %45 = vector.extract_strided_slice %42 {offsets = [0, 64], sizes = [1, 32], strides = [1, 1]} : vector<1x96xf32> to vector<1x32xf32>
    %46 = vector.extract_strided_slice %36 {offsets = [0, 96], sizes = [1, 32], strides = [1, 1]} : vector<1x128xf32> to vector<1x32xf32>
    %47 = math.tanh %46 : vector<1x32xf32>
    %48 = arith.mulf %44, %30 : vector<1x32xf32>
    %49 = arith.mulf %43, %47 : vector<1x32xf32>
    %50 = arith.addf %48, %49 : vector<1x32xf32>
    %51 = math.tanh %50 : vector<1x32xf32>
    %52 = arith.mulf %45, %51 : vector<1x32xf32>
    %c0_30 = arith.constant 0 : index
    %c0_31 = arith.constant 0 : index
    %c0_32 = arith.constant 0 : index
    %53 = vector.load %arg12[%c0_30, %c0_31, %c0_32] : memref<1x8x32xf32, #tpu.memory_space<vmem>>, vector<1x1x32xf32>
    %54 = vector.shape_cast %53 : vector<1x1x32xf32> to vector<1x32xf32>
    %55 = vector.shape_cast %52 : vector<1x32xf32> to vector<1x1x32xf32>
    tpu.vector_store %arg12[%c0_30, %c0_31, %c0_32], %55 {strides = array<i32>} : memref<1x8x32xf32, #tpu.memory_space<vmem>>, vector<1x1x32xf32>,
    %cst_33 = arith.constant dense<0.000000e+00> : vector<1x4xf32>
    %56 = tpu.matmul %52, %27, %cst_33 {dimension_numbers = #tpu.dot_dimension_numbers<[1], [0], [0], [1], [0, 0, 1, 1], [], []>} : vector<1x32xf32>, vector<32x4xf32>, vector<1x4xf32> -> vector<1x4xf32>
    %57 = arith.addf %56, %28 : vector<1x4xf32>
    %58 = tpu.concatenate %52, %57 in 1 : vector<1x32xf32>, vector<1x4xf32> -> vector<1x36xf32>
    %59 = vector.extract_strided_slice %25 {offsets = [1, 0], sizes = [1, 128], strides = [1, 1]} : vector<8x128xf32> to vector<1x128xf32>
    %cst_34 = arith.constant dense<0.000000e+00> : vector<1x128xf32>
    %60 = tpu.matmul %58, %26, %cst_34 {dimension_numbers = #tpu.dot_dimension_numbers<[1], [0], [0], [1], [0, 0, 1, 1], [], []>} : vector<1x36xf32>, vector<36x128xf32>, vector<1x128xf32> -> vector<1x128xf32>
    %61 = arith.addf %59, %60 : vector<1x128xf32>
    %62 = vector.extract_strided_slice %61 {offsets = [0, 0], sizes = [1, 96], strides = [1, 1]} : vector<1x128xf32> to vector<1x96xf32>
    %63 = arith.negf %62 : vector<1x96xf32>
    %64 = math.exp %63 : vector<1x96xf32>
    %cst_35 = arith.constant 1.000000e+00 : f32
    %65 = vector.broadcast %cst_35 : f32 to vector<1x96xf32>
    %66 = arith.addf %65, %64 : vector<1x96xf32>
    %67 = arith.divf %65, %66 : vector<1x96xf32>
    %68 = vector.extract_strided_slice %67 {offsets = [0, 0], sizes = [1, 32], strides = [1, 1]} : vector<1x96xf32> to vector<1x32xf32>
    %69 = vector.extract_strided_slice %67 {offsets = [0, 32], sizes = [1, 32], strides = [1, 1]} : vector<1x96xf32> to vector<1x32xf32>
    %70 = vector.extract_strided_slice %67 {offsets = [0, 64], sizes = [1, 32], strides = [1, 1]} : vector<1x96xf32> to vector<1x32xf32>
    %71 = vector.extract_strided_slice %61 {offsets = [0, 96], sizes = [1, 32], strides = [1, 1]} : vector<1x128xf32> to vector<1x32xf32>
    %72 = math.tanh %71 : vector<1x32xf32>
    %73 = arith.mulf %69, %50 : vector<1x32xf32>
    %74 = arith.mulf %68, %72 : vector<1x32xf32>
    %75 = arith.addf %73, %74 : vector<1x32xf32>
    %76 = math.tanh %75 : vector<1x32xf32>
    %77 = arith.mulf %70, %76 : vector<1x32xf32>
    %c0_36 = arith.constant 0 : index
    %c1 = arith.constant 1 : index
    %c0_37 = arith.constant 0 : index
    %78 = vector.load %arg12[%c0_36, %c1, %c0_37] : memref<1x8x32xf32, #tpu.memory_space<vmem>>, vector<1x1x32xf32>
    %79 = vector.shape_cast %78 : vector<1x1x32xf32> to vector<1x32xf32>
    %80 = vector.shape_cast %77 : vector<1x32xf32> to vector<1x1x32xf32>
    tpu.vector_store %arg12[%c0_36, %c1, %c0_37], %80 {strides = array<i32>} : memref<1x8x32xf32, #tpu.memory_space<vmem>>, vector<1x1x32xf32>,
    %cst_38 = arith.constant dense<0.000000e+00> : vector<1x4xf32>
    %81 = tpu.matmul %77, %27, %cst_38 {dimension_numbers = #tpu.dot_dimension_numbers<[1], [0], [0], [1], [0, 0, 1, 1], [], []>} : vector<1x32xf32>, vector<32x4xf32>, vector<1x4xf32> -> vector<1x4xf32>
    %82 = arith.addf %81, %28 : vector<1x4xf32>
    %83 = tpu.concatenate %77, %82 in 1 : vector<1x32xf32>, vector<1x4xf32> -> vector<1x36xf32>
    %84 = vector.extract_strided_slice %25 {offsets = [2, 0], sizes = [1, 128], strides = [1, 1]} : vector<8x128xf32> to vector<1x128xf32>
    %cst_39 = arith.constant dense<0.000000e+00> : vector<1x128xf32>
    %85 = tpu.matmul %83, %26, %cst_39 {dimension_numbers = #tpu.dot_dimension_numbers<[1], [0], [0], [1], [0, 0, 1, 1], [], []>} : vector<1x36xf32>, vector<36x128xf32>, vector<1x128xf32> -> vector<1x128xf32>
    %86 = arith.addf %84, %85 : vector<1x128xf32>
    %87 = vector.extract_strided_slice %86 {offsets = [0, 0], sizes = [1, 96], strides = [1, 1]} : vector<1x128xf32> to vector<1x96xf32>
    %88 = arith.negf %87 : vector<1x96xf32>
    %89 = math.exp %88 : vector<1x96xf32>
    %cst_40 = arith.constant 1.000000e+00 : f32
    %90 = vector.broadcast %cst_40 : f32 to vector<1x96xf32>
    %91 = arith.addf %90, %89 : vector<1x96xf32>
    %92 = arith.divf %90, %91 : vector<1x96xf32>
    %93 = vector.extract_strided_slice %92 {offsets = [0, 0], sizes = [1, 32], strides = [1, 1]} : vector<1x96xf32> to vector<1x32xf32>
    %94 = vector.extract_strided_slice %92 {offsets = [0, 32], sizes = [1, 32], strides = [1, 1]} : vector<1x96xf32> to vector<1x32xf32>
    %95 = vector.extract_strided_slice %92 {offsets = [0, 64], sizes = [1, 32], strides = [1, 1]} : vector<1x96xf32> to vector<1x32xf32>
    %96 = vector.extract_strided_slice %86 {offsets = [0, 96], sizes = [1, 32], strides = [1, 1]} : vector<1x128xf32> to vector<1x32xf32>
    %97 = math.tanh %96 : vector<1x32xf32>
    %98 = arith.mulf %94, %75 : vector<1x32xf32>
    %99 = arith.mulf %93, %97 : vector<1x32xf32>
    %100 = arith.addf %98, %99 : vector<1x32xf32>
    %101 = math.tanh %100 : vector<1x32xf32>
    %102 = arith.mulf %95, %101 : vector<1x32xf32>
    %c0_41 = arith.constant 0 : index
    %c2 = arith.constant 2 : index
    %c0_42 = arith.constant 0 : index
    %103 = vector.load %arg12[%c0_41, %c2, %c0_42] : memref<1x8x32xf32, #tpu.memory_space<vmem>>, vector<1x1x32xf32>
    %104 = vector.shape_cast %103 : vector<1x1x32xf32> to vector<1x32xf32>
    %105 = vector.shape_cast %102 : vector<1x32xf32> to vector<1x1x32xf32>
    tpu.vector_store %arg12[%c0_41, %c2, %c0_42], %105 {strides = array<i32>} : memref<1x8x32xf32, #tpu.memory_space<vmem>>, vector<1x1x32xf32>,
    %cst_43 = arith.constant dense<0.000000e+00> : vector<1x4xf32>
    %106 = tpu.matmul %102, %27, %cst_43 {dimension_numbers = #tpu.dot_dimension_numbers<[1], [0], [0], [1], [0, 0, 1, 1], [], []>} : vector<1x32xf32>, vector<32x4xf32>, vector<1x4xf32> -> vector<1x4xf32>
    %107 = arith.addf %106, %28 : vector<1x4xf32>
    %108 = tpu.concatenate %102, %107 in 1 : vector<1x32xf32>, vector<1x4xf32> -> vector<1x36xf32>
    %109 = vector.extract_strided_slice %25 {offsets = [3, 0], sizes = [1, 128], strides = [1, 1]} : vector<8x128xf32> to vector<1x128xf32>
    %cst_44 = arith.constant dense<0.000000e+00> : vector<1x128xf32>
    %110 = tpu.matmul %108, %26, %cst_44 {dimension_numbers = #tpu.dot_dimension_numbers<[1], [0], [0], [1], [0, 0, 1, 1], [], []>} : vector<1x36xf32>, vector<36x128xf32>, vector<1x128xf32> -> vector<1x128xf32>
    %111 = arith.addf %109, %110 : vector<1x128xf32>
    %112 = vector.extract_strided_slice %111 {offsets = [0, 0], sizes = [1, 96], strides = [1, 1]} : vector<1x128xf32> to vector<1x96xf32>
    %113 = arith.negf %112 : vector<1x96xf32>
    %114 = math.exp %113 : vector<1x96xf32>
    %cst_45 = arith.constant 1.000000e+00 : f32
    %115 = vector.broadcast %cst_45 : f32 to vector<1x96xf32>
    %116 = arith.addf %115, %114 : vector<1x96xf32>
    %117 = arith.divf %115, %116 : vector<1x96xf32>
    %118 = vector.extract_strided_slice %117 {offsets = [0, 0], sizes = [1, 32], strides = [1, 1]} : vector<1x96xf32> to vector<1x32xf32>
    %119 = vector.extract_strided_slice %117 {offsets = [0, 32], sizes = [1, 32], strides = [1, 1]} : vector<1x96xf32> to vector<1x32xf32>
    %120 = vector.extract_strided_slice %117 {offsets = [0, 64], sizes = [1, 32], strides = [1, 1]} : vector<1x96xf32> to vector<1x32xf32>
    %121 = vector.extract_strided_slice %111 {offsets = [0, 96], sizes = [1, 32], strides = [1, 1]} : vector<1x128xf32> to vector<1x32xf32>
    %122 = math.tanh %121 : vector<1x32xf32>
    %123 = arith.mulf %119, %100 : vector<1x32xf32>
    %124 = arith.mulf %118, %122 : vector<1x32xf32>
    %125 = arith.addf %123, %124 : vector<1x32xf32>
    %126 = math.tanh %125 : vector<1x32xf32>
    %127 = arith.mulf %120, %126 : vector<1x32xf32>
    %c0_46 = arith.constant 0 : index
    %c3 = arith.constant 3 : index
    %c0_47 = arith.constant 0 : index
    %128 = vector.load %arg12[%c0_46, %c3, %c0_47] : memref<1x8x32xf32, #tpu.memory_space<vmem>>, vector<1x1x32xf32>
    %129 = vector.shape_cast %128 : vector<1x1x32xf32> to vector<1x32xf32>
    %130 = vector.shape_cast %127 : vector<1x32xf32> to vector<1x1x32xf32>
    tpu.vector_store %arg12[%c0_46, %c3, %c0_47], %130 {strides = array<i32>} : memref<1x8x32xf32, #tpu.memory_space<vmem>>, vector<1x1x32xf32>,
    %cst_48 = arith.constant dense<0.000000e+00> : vector<1x4xf32>
    %131 = tpu.matmul %127, %27, %cst_48 {dimension_numbers = #tpu.dot_dimension_numbers<[1], [0], [0], [1], [0, 0, 1, 1], [], []>} : vector<1x32xf32>, vector<32x4xf32>, vector<1x4xf32> -> vector<1x4xf32>
    %132 = arith.addf %131, %28 : vector<1x4xf32>
    %133 = tpu.concatenate %127, %132 in 1 : vector<1x32xf32>, vector<1x4xf32> -> vector<1x36xf32>
    %134 = vector.extract_strided_slice %25 {offsets = [4, 0], sizes = [1, 128], strides = [1, 1]} : vector<8x128xf32> to vector<1x128xf32>
    %cst_49 = arith.constant dense<0.000000e+00> : vector<1x128xf32>
    %135 = tpu.matmul %133, %26, %cst_49 {dimension_numbers = #tpu.dot_dimension_numbers<[1], [0], [0], [1], [0, 0, 1, 1], [], []>} : vector<1x36xf32>, vector<36x128xf32>, vector<1x128xf32> -> vector<1x128xf32>
    %136 = arith.addf %134, %135 : vector<1x128xf32>
    %137 = vector.extract_strided_slice %136 {offsets = [0, 0], sizes = [1, 96], strides = [1, 1]} : vector<1x128xf32> to vector<1x96xf32>
    %138 = arith.negf %137 : vector<1x96xf32>
    %139 = math.exp %138 : vector<1x96xf32>
    %cst_50 = arith.constant 1.000000e+00 : f32
    %140 = vector.broadcast %cst_50 : f32 to vector<1x96xf32>
    %141 = arith.addf %140, %139 : vector<1x96xf32>
    %142 = arith.divf %140, %141 : vector<1x96xf32>
    %143 = vector.extract_strided_slice %142 {offsets = [0, 0], sizes = [1, 32], strides = [1, 1]} : vector<1x96xf32> to vector<1x32xf32>
    %144 = vector.extract_strided_slice %142 {offsets = [0, 32], sizes = [1, 32], strides = [1, 1]} : vector<1x96xf32> to vector<1x32xf32>
    %145 = vector.extract_strided_slice %142 {offsets = [0, 64], sizes = [1, 32], strides = [1, 1]} : vector<1x96xf32> to vector<1x32xf32>
    %146 = vector.extract_strided_slice %136 {offsets = [0, 96], sizes = [1, 32], strides = [1, 1]} : vector<1x128xf32> to vector<1x32xf32>
    %147 = math.tanh %146 : vector<1x32xf32>
    %148 = arith.mulf %144, %125 : vector<1x32xf32>
    %149 = arith.mulf %143, %147 : vector<1x32xf32>
    %150 = arith.addf %148, %149 : vector<1x32xf32>
    %151 = math.tanh %150 : vector<1x32xf32>
    %152 = arith.mulf %145, %151 : vector<1x32xf32>
    %c0_51 = arith.constant 0 : index
    %c4 = arith.constant 4 : index
    %c0_52 = arith.constant 0 : index
    %153 = vector.load %arg12[%c0_51, %c4, %c0_52] : memref<1x8x32xf32, #tpu.memory_space<vmem>>, vector<1x1x32xf32>
    %154 = vector.shape_cast %153 : vector<1x1x32xf32> to vector<1x32xf32>
    %155 = vector.shape_cast %152 : vector<1x32xf32> to vector<1x1x32xf32>
    tpu.vector_store %arg12[%c0_51, %c4, %c0_52], %155 {strides = array<i32>} : memref<1x8x32xf32, #tpu.memory_space<vmem>>, vector<1x1x32xf32>,
    %cst_53 = arith.constant dense<0.000000e+00> : vector<1x4xf32>
    %156 = tpu.matmul %152, %27, %cst_53 {dimension_numbers = #tpu.dot_dimension_numbers<[1], [0], [0], [1], [0, 0, 1, 1], [], []>} : vector<1x32xf32>, vector<32x4xf32>, vector<1x4xf32> -> vector<1x4xf32>
    %157 = arith.addf %156, %28 : vector<1x4xf32>
    %158 = tpu.concatenate %152, %157 in 1 : vector<1x32xf32>, vector<1x4xf32> -> vector<1x36xf32>
    %159 = vector.extract_strided_slice %25 {offsets = [5, 0], sizes = [1, 128], strides = [1, 1]} : vector<8x128xf32> to vector<1x128xf32>
    %cst_54 = arith.constant dense<0.000000e+00> : vector<1x128xf32>
    %160 = tpu.matmul %158, %26, %cst_54 {dimension_numbers = #tpu.dot_dimension_numbers<[1], [0], [0], [1], [0, 0, 1, 1], [], []>} : vector<1x36xf32>, vector<36x128xf32>, vector<1x128xf32> -> vector<1x128xf32>
    %161 = arith.addf %159, %160 : vector<1x128xf32>
    %162 = vector.extract_strided_slice %161 {offsets = [0, 0], sizes = [1, 96], strides = [1, 1]} : vector<1x128xf32> to vector<1x96xf32>
    %163 = arith.negf %162 : vector<1x96xf32>
    %164 = math.exp %163 : vector<1x96xf32>
    %cst_55 = arith.constant 1.000000e+00 : f32
    %165 = vector.broadcast %cst_55 : f32 to vector<1x96xf32>
    %166 = arith.addf %165, %164 : vector<1x96xf32>
    %167 = arith.divf %165, %166 : vector<1x96xf32>
    %168 = vector.extract_strided_slice %167 {offsets = [0, 0], sizes = [1, 32], strides = [1, 1]} : vector<1x96xf32> to vector<1x32xf32>
    %169 = vector.extract_strided_slice %167 {offsets = [0, 32], sizes = [1, 32], strides = [1, 1]} : vector<1x96xf32> to vector<1x32xf32>
    %170 = vector.extract_strided_slice %167 {offsets = [0, 64], sizes = [1, 32], strides = [1, 1]} : vector<1x96xf32> to vector<1x32xf32>
    %171 = vector.extract_strided_slice %161 {offsets = [0, 96], sizes = [1, 32], strides = [1, 1]} : vector<1x128xf32> to vector<1x32xf32>
    %172 = math.tanh %171 : vector<1x32xf32>
    %173 = arith.mulf %169, %150 : vector<1x32xf32>
    %174 = arith.mulf %168, %172 : vector<1x32xf32>
    %175 = arith.addf %173, %174 : vector<1x32xf32>
    %176 = math.tanh %175 : vector<1x32xf32>
    %177 = arith.mulf %170, %176 : vector<1x32xf32>
    %c0_56 = arith.constant 0 : index
    %c5 = arith.constant 5 : index
    %c0_57 = arith.constant 0 : index
    %178 = vector.load %arg12[%c0_56, %c5, %c0_57] : memref<1x8x32xf32, #tpu.memory_space<vmem>>, vector<1x1x32xf32>
    %179 = vector.shape_cast %178 : vector<1x1x32xf32> to vector<1x32xf32>
    %180 = vector.shape_cast %177 : vector<1x32xf32> to vector<1x1x32xf32>
    tpu.vector_store %arg12[%c0_56, %c5, %c0_57], %180 {strides = array<i32>} : memref<1x8x32xf32, #tpu.memory_space<vmem>>, vector<1x1x32xf32>,
    %cst_58 = arith.constant dense<0.000000e+00> : vector<1x4xf32>
    %181 = tpu.matmul %177, %27, %cst_58 {dimension_numbers = #tpu.dot_dimension_numbers<[1], [0], [0], [1], [0, 0, 1, 1], [], []>} : vector<1x32xf32>, vector<32x4xf32>, vector<1x4xf32> -> vector<1x4xf32>
    %182 = arith.addf %181, %28 : vector<1x4xf32>
    %183 = tpu.concatenate %177, %182 in 1 : vector<1x32xf32>, vector<1x4xf32> -> vector<1x36xf32>
    %184 = vector.extract_strided_slice %25 {offsets = [6, 0], sizes = [1, 128], strides = [1, 1]} : vector<8x128xf32> to vector<1x128xf32>
    %cst_59 = arith.constant dense<0.000000e+00> : vector<1x128xf32>
    %185 = tpu.matmul %183, %26, %cst_59 {dimension_numbers = #tpu.dot_dimension_numbers<[1], [0], [0], [1], [0, 0, 1, 1], [], []>} : vector<1x36xf32>, vector<36x128xf32>, vector<1x128xf32> -> vector<1x128xf32>
    %186 = arith.addf %184, %185 : vector<1x128xf32>
    %187 = vector.extract_strided_slice %186 {offsets = [0, 0], sizes = [1, 96], strides = [1, 1]} : vector<1x128xf32> to vector<1x96xf32>
    %188 = arith.negf %187 : vector<1x96xf32>
    %189 = math.exp %188 : vector<1x96xf32>
    %cst_60 = arith.constant 1.000000e+00 : f32
    %190 = vector.broadcast %cst_60 : f32 to vector<1x96xf32>
    %191 = arith.addf %190, %189 : vector<1x96xf32>
    %192 = arith.divf %190, %191 : vector<1x96xf32>
    %193 = vector.extract_strided_slice %192 {offsets = [0, 0], sizes = [1, 32], strides = [1, 1]} : vector<1x96xf32> to vector<1x32xf32>
    %194 = vector.extract_strided_slice %192 {offsets = [0, 32], sizes = [1, 32], strides = [1, 1]} : vector<1x96xf32> to vector<1x32xf32>
    %195 = vector.extract_strided_slice %192 {offsets = [0, 64], sizes = [1, 32], strides = [1, 1]} : vector<1x96xf32> to vector<1x32xf32>
    %196 = vector.extract_strided_slice %186 {offsets = [0, 96], sizes = [1, 32], strides = [1, 1]} : vector<1x128xf32> to vector<1x32xf32>
    %197 = math.tanh %196 : vector<1x32xf32>
    %198 = arith.mulf %194, %175 : vector<1x32xf32>
    %199 = arith.mulf %193, %197 : vector<1x32xf32>
    %200 = arith.addf %198, %199 : vector<1x32xf32>
    %201 = math.tanh %200 : vector<1x32xf32>
    %202 = arith.mulf %195, %201 : vector<1x32xf32>
    %c0_61 = arith.constant 0 : index
    %c6 = arith.constant 6 : index
    %c0_62 = arith.constant 0 : index
    %203 = vector.load %arg12[%c0_61, %c6, %c0_62] : memref<1x8x32xf32, #tpu.memory_space<vmem>>, vector<1x1x32xf32>
    %204 = vector.shape_cast %203 : vector<1x1x32xf32> to vector<1x32xf32>
    %205 = vector.shape_cast %202 : vector<1x32xf32> to vector<1x1x32xf32>
    tpu.vector_store %arg12[%c0_61, %c6, %c0_62], %205 {strides = array<i32>} : memref<1x8x32xf32, #tpu.memory_space<vmem>>, vector<1x1x32xf32>,
    %cst_63 = arith.constant dense<0.000000e+00> : vector<1x4xf32>
    %206 = tpu.matmul %202, %27, %cst_63 {dimension_numbers = #tpu.dot_dimension_numbers<[1], [0], [0], [1], [0, 0, 1, 1], [], []>} : vector<1x32xf32>, vector<32x4xf32>, vector<1x4xf32> -> vector<1x4xf32>
    %207 = arith.addf %206, %28 : vector<1x4xf32>
    %208 = tpu.concatenate %202, %207 in 1 : vector<1x32xf32>, vector<1x4xf32> -> vector<1x36xf32>
    %209 = vector.extract_strided_slice %25 {offsets = [7, 0], sizes = [1, 128], strides = [1, 1]} : vector<8x128xf32> to vector<1x128xf32>
    %cst_64 = arith.constant dense<0.000000e+00> : vector<1x128xf32>
    %210 = tpu.matmul %208, %26, %cst_64 {dimension_numbers = #tpu.dot_dimension_numbers<[1], [0], [0], [1], [0, 0, 1, 1], [], []>} : vector<1x36xf32>, vector<36x128xf32>, vector<1x128xf32> -> vector<1x128xf32>
    %211 = arith.addf %209, %210 : vector<1x128xf32>
    %212 = vector.extract_strided_slice %211 {offsets = [0, 0], sizes = [1, 96], strides = [1, 1]} : vector<1x128xf32> to vector<1x96xf32>
    %213 = arith.negf %212 : vector<1x96xf32>
    %214 = math.exp %213 : vector<1x96xf32>
    %cst_65 = arith.constant 1.000000e+00 : f32
    %215 = vector.broadcast %cst_65 : f32 to vector<1x96xf32>
    %216 = arith.addf %215, %214 : vector<1x96xf32>
    %217 = arith.divf %215, %216 : vector<1x96xf32>
    %218 = vector.extract_strided_slice %217 {offsets = [0, 0], sizes = [1, 32], strides = [1, 1]} : vector<1x96xf32> to vector<1x32xf32>
    %219 = vector.extract_strided_slice %217 {offsets = [0, 32], sizes = [1, 32], strides = [1, 1]} : vector<1x96xf32> to vector<1x32xf32>
    %220 = vector.extract_strided_slice %217 {offsets = [0, 64], sizes = [1, 32], strides = [1, 1]} : vector<1x96xf32> to vector<1x32xf32>
    %221 = vector.extract_strided_slice %211 {offsets = [0, 96], sizes = [1, 32], strides = [1, 1]} : vector<1x128xf32> to vector<1x32xf32>
    %222 = math.tanh %221 : vector<1x32xf32>
    %223 = arith.mulf %219, %200 : vector<1x32xf32>
    %224 = arith.mulf %218, %222 : vector<1x32xf32>
    %225 = arith.addf %223, %224 : vector<1x32xf32>
    %226 = math.tanh %225 : vector<1x32xf32>
    %227 = arith.mulf %220, %226 : vector<1x32xf32>
    %c0_66 = arith.constant 0 : index
    %c7 = arith.constant 7 : index
    %c0_67 = arith.constant 0 : index
    %228 = vector.load %arg12[%c0_66, %c7, %c0_67] : memref<1x8x32xf32, #tpu.memory_space<vmem>>, vector<1x1x32xf32>
    %229 = vector.shape_cast %228 : vector<1x1x32xf32> to vector<1x32xf32>
    %230 = vector.shape_cast %227 : vector<1x32xf32> to vector<1x1x32xf32>
    tpu.vector_store %arg12[%c0_66, %c7, %c0_67], %230 {strides = array<i32>} : memref<1x8x32xf32, #tpu.memory_space<vmem>>, vector<1x1x32xf32>,
    %cst_68 = arith.constant dense<0.000000e+00> : vector<1x4xf32>
    %231 = tpu.matmul %227, %27, %cst_68 {dimension_numbers = #tpu.dot_dimension_numbers<[1], [0], [0], [1], [0, 0, 1, 1], [], []>} : vector<1x32xf32>, vector<32x4xf32>, vector<1x4xf32> -> vector<1x4xf32>
    %232 = arith.addf %231, %28 : vector<1x4xf32>
    %c0_69 = arith.constant 0 : index
    %c0_70 = arith.constant 0 : index
    %c0_71 = arith.constant 0 : index
    %233 = vector.load %arg11[%c0_69, %c0_70, %c0_71] : memref<1x1x4xf32, #tpu.memory_space<vmem>>, vector<1x1x4xf32>
    %234 = vector.shape_cast %233 : vector<1x1x4xf32> to vector<1x4xf32>
    %235 = vector.shape_cast %232 : vector<1x4xf32> to vector<1x1x4xf32>
    tpu.vector_store %arg11[%c0_69, %c0_70, %c0_71], %235 {strides = array<i32>} : memref<1x1x4xf32, #tpu.memory_space<vmem>>, vector<1x1x4xf32>,
    return
  }
  func.func @transform_0(%arg0: i32) -> (i32, i32, i32) {
    %c0_i32 = arith.constant 0 : i32
    %c0_i32_0 = arith.constant 0 : i32
    %c0_i32_1 = arith.constant 0 : i32
    return %arg0, %c0_i32, %c0_i32_0 : i32, i32, i32
  }
  func.func @transform_1(%arg0: i32) -> (i32, i32, i32) {
    %c0_i32 = arith.constant 0 : i32
    %c0_i32_0 = arith.constant 0 : i32
    %c0_i32_1 = arith.constant 0 : i32
    return %arg0, %c0_i32, %c0_i32_0 : i32, i32, i32
  }
  func.func @transform_2(%arg0: i32) -> (i32, i32) {
    %c0_i32 = arith.constant 0 : i32
    %c0_i32_0 = arith.constant 0 : i32
    %c0_i32_1 = arith.constant 0 : i32
    return %c0_i32, %c0_i32_0 : i32, i32
  }
  func.func @transform_3(%arg0: i32) -> (i32, i32) {
    %c0_i32 = arith.constant 0 : i32
    %c0_i32_0 = arith.constant 0 : i32
    %c0_i32_1 = arith.constant 0 : i32
    return %c0_i32, %c0_i32_0 : i32, i32
  }
  func.func @transform_4(%arg0: i32) -> (i32, i32) {
    %c0_i32 = arith.constant 0 : i32
    %c0_i32_0 = arith.constant 0 : i32
    %c0_i32_1 = arith.constant 0 : i32
    return %c0_i32, %c0_i32_0 : i32, i32
  }
  func.func @transform_5(%arg0: i32) -> (i32, i32) {
    %c0_i32 = arith.constant 0 : i32
    %c0_i32_0 = arith.constant 0 : i32
    %c0_i32_1 = arith.constant 0 : i32
    return %c0_i32, %c0_i32_0 : i32, i32
  }
  func.func @transform_6(%arg0: i32) -> (i32, i32) {
    %c0_i32 = arith.constant 0 : i32
    %c0_i32_0 = arith.constant 0 : i32
    %c0_i32_1 = arith.constant 0 : i32
    return %c0_i32, %c0_i32_0 : i32, i32
  }
  func.func @transform_7(%arg0: i32) -> (i32, i32) {
    %c0_i32 = arith.constant 0 : i32
    %c0_i32_0 = arith.constant 0 : i32
    %c0_i32_1 = arith.constant 0 : i32
    return %c0_i32, %c0_i32_0 : i32, i32
  }
  func.func @transform_8(%arg0: i32) -> (i32, i32) {
    %c0_i32 = arith.constant 0 : i32
    %c0_i32_0 = arith.constant 0 : i32
    %c0_i32_1 = arith.constant 0 : i32
    return %c0_i32, %c0_i32_0 : i32, i32
  }
  func.func @transform_9(%arg0: i32) -> (i32, i32) {
    %c0_i32 = arith.constant 0 : i32
    %c0_i32_0 = arith.constant 0 : i32
    %c0_i32_1 = arith.constant 0 : i32
    return %c0_i32, %c0_i32_0 : i32, i32
  }
  func.func @transform_10(%arg0: i32) -> (i32, i32, i32) {
    %c0_i32 = arith.constant 0 : i32
    %c0_i32_0 = arith.constant 0 : i32
    %c0_i32_1 = arith.constant 0 : i32
    return %arg0, %c0_i32, %c0_i32_0 : i32, i32, i32
  }
  func.func @transform_11(%arg0: i32) -> (i32, i32, i32) {
    %c0_i32 = arith.constant 0 : i32
    %c0_i32_0 = arith.constant 0 : i32
    %c0_i32_1 = arith.constant 0 : i32
    return %arg0, %c0_i32, %c0_i32_0 : i32, i32, i32
  }
}

</mosaic_0001>

<llo_original>
// kernel: tpu_custom_call.1
$region0: #{tpu_custom_call.1}
  #allocation0 [shape = 'u32[]', space=smem, size = 0x4, offset = 0x4, fixed_abs, tag = 'smem constant byte address 0x4 - core index']
  #allocation1 [shape = 'u32[144,128]{1,0:T(1,128)}', space=vmem, size = 0x12000, scoped, tag = 'internal scratch']
  %s0 = inlined_call_operand.vmem [shape: f32[2,8,4], index: 0, kind: input, shape index: {}]
  %s1 = inlined_call_operand.vmem [shape: f32[2,1,4], index: 1, kind: input, shape index: {}]
  %s2 = inlined_call_operand.vmem [shape: f32[4,8], index: 2, kind: input, shape index: {}]
  %s3 = inlined_call_operand.vmem [shape: f32[1,8], index: 3, kind: input, shape index: {}]
  %s4 = inlined_call_operand.vmem [shape: f32[8,8], index: 4, kind: input, shape index: {}]
  %s5 = inlined_call_operand.vmem [shape: f32[4,128], index: 5, kind: input, shape index: {}]
  %s6 = inlined_call_operand.vmem [shape: f32[36,128], index: 6, kind: input, shape index: {}]
  %s7 = inlined_call_operand.vmem [shape: f32[1,128], index: 7, kind: input, shape index: {}]
  %s8 = inlined_call_operand.vmem [shape: f32[32,4], index: 8, kind: input, shape index: {}]
  %s9 = inlined_call_operand.vmem [shape: f32[1,4], index: 9, kind: input, shape index: {}]
  %s10 = inlined_call_operand.hbm [shape: f32[2,1,4], index: 10, kind: output, shape index: {0}]
  %s11 = inlined_call_operand.hbm [shape: f32[2,8,32], index: 11, kind: output, shape index: {1}]
  %12 = xla_tuple %s10, %s11
  %s13 = sld [smem:[#allocation0]]
  $region81: #{tpu_custom_call.1} parent=0
    _
  %s15 = ssub.s32 1, %s13
  %s16 = scalar_select 0, %s15, %s13
  $region1: #{tpu_custom_call.1} parent=0
    #allocation2 [shape = 'u8[1024]{0}', space=vmem, size = 0x400, scoped, tag = 'output window, operand 0']
    #allocation3 [shape = 's32[2]{0}', space=sflag, size = 0x8, scoped, tag = 'scoped memory for tpu_custom_call.1']
    #allocation4 [shape = 'u8[8192]{0}', space=vmem, size = 0x2000, scoped, tag = 'output window, operand 1']
    #allocation5 [shape = 's32[2]{0}', space=sflag, size = 0x8, scoped, tag = 'scoped memory for tpu_custom_call.1']
    %17 = vsyncpa [#allocation3], 0
    %s18 = scalar_lea.sflag [#allocation3], 1
    %19 = vsyncpa %s18, 0
    %20 = vsyncpa [#allocation5], 0
    %s21 = scalar_lea.sflag [#allocation5], 1
    %22 = vsyncpa %s21, 0
    loop: start=0, step=1, limit=4
    $region2: #{tpu_custom_call.1} parent=1 // loop_pre_header
      _
    $region3: #{tpu_custom_call.1} parent=1 // loop_header
      %s24 = sphi 0, %s28
      %p25 = scmp.ge.s32.totalorder %s24, 4
      %s34 = sphi 0, %s36
      %s37 = sphi 0, %s34
      %s38 = sphi 0, %s37
      %s54 = sphi 0, %s38
      %s60 = sphi 0, %s62
      %s63 = sphi 0, %s60
      %s64 = sphi 0, %s63
      %s80 = sphi 0, %s64
      %s84 = sphi 0, %s84
      %s86 = sphi 0, %s84
      %s87 = sphi 0, %s86
      %s101 = sphi 0, %s87
      %s105 = sphi 0, %s105
      %s107 = sphi 0, %s105
      %s108 = sphi 0, %s107
      %s122 = sphi 0, %s108
      %s126 = sphi 0, %s126
      %s128 = sphi 0, %s126
      %s129 = sphi 0, %s128
      %s143 = sphi 0, %s129
      %s147 = sphi 0, %s147
      %s149 = sphi 0, %s147
      %s150 = sphi 0, %s149
      %s164 = sphi 0, %s150
      %s168 = sphi 0, %s168
      %s170 = sphi 0, %s168
      %s171 = sphi 0, %s170
      %s185 = sphi 0, %s171
      %s189 = sphi 0, %s189
      %s191 = sphi 0, %s189
      %s192 = sphi 0, %s191
      %s206 = sphi 0, %s192
      %s210 = sphi 0, %s210
      %s212 = sphi 0, %s210
      %s213 = sphi 0, %s212
      %s227 = sphi 0, %s213
      %s231 = sphi 0, %s231
      %s233 = sphi 0, %s231
      %s234 = sphi 0, %s233
      %s248 = sphi 0, %s234
      %s254 = sphi 0, %s256
      %s257 = sphi 0, %s254
      %s258 = sphi 0, %s257
      %s274 = sphi 0, %s258
      %s280 = sphi 0, %s282
      %s283 = sphi 0, %s280
      %s284 = sphi 0, %s283
      %s300 = sphi 0, %s284
    $region4: #{tpu_custom_call.1} parent=1 // loop_header_branch
      %27 = sbr.rel (%p25) target = $region8
    $region5: #{tpu_custom_call.1} parent=1 // loop_body
      %s29 = ssub.s32 %s24, 1
      %s30 = ssub.s32 %s24, 2
      %s31 = sadd.s32 %s24, 1
      %s32 = ssub.s32 %s24, %s31
      %p33 = scmp.eq.s32.totalorder %s32, 0
      %s35 = sadd.s32 %s34, 1
      %s36 = scalar_select %p33, %s34, %s35
      %p39 = pneg %p33
      %p40 = scmp.eq.s32.totalorder %s24, 1
      %p41 = por %p39, %p40
      %p42 = scmp.ne.s32.totalorder %s34, %s37
      %p43 = scmp.eq.s32.totalorder %s24, 0
      %p44 = por %p42, %p43
      %p45 = scmp.ne.s32.totalorder %s34, %s37
      %p46 = scmp.eq.s32.totalorder %s29, 1
      %p47 = por %p45, %p46
      %p48 = scmp.ne.s32.totalorder %s37, %s38
      %p49 = scmp.eq.s32.totalorder %s29, 0
      %p50 = por %p48, %p49
      %p51 = scmp.ne.s32.totalorder %s37, %s38
      %p52 = scmp.eq.s32.totalorder %s30, 1
      %p53 = por %p51, %p52
      %p55 = scmp.ne.s32.totalorder %s38, %s54
      %p56 = scmp.eq.s32.totalorder %s30, 0
      %p57 = por %p55, %p56
      %s58 = ssub.s32 %s24, %s31
      %p59 = scmp.eq.s32.totalorder %s58, 0
      %s61 = sadd.s32 %s60, 1
      %s62 = scalar_select %p59, %s60, %s61
      %p65 = pneg %p59
      %p66 = scmp.eq.s32.totalorder %s24, 1
      %p67 = por %p65, %p66
      %p68 = scmp.ne.s32.totalorder %s60, %s63
      %p69 = scmp.eq.s32.totalorder %s24, 0
      %p70 = por %p68, %p69
      %p71 = scmp.ne.s32.totalorder %s60, %s63
      %p72 = scmp.eq.s32.totalorder %s29, 1
      %p73 = por %p71, %p72
      %p74 = scmp.ne.s32.totalorder %s63, %s64
      %p75 = scmp.eq.s32.totalorder %s29, 0
      %p76 = por %p74, %p75
      %p77 = scmp.ne.s32.totalorder %s63, %s64
      %p78 = scmp.eq.s32.totalorder %s30, 1
      %p79 = por %p77, %p78
      %p81 = scmp.ne.s32.totalorder %s64, %s80
      %p82 = scmp.eq.s32.totalorder %s30, 0
      %p83 = por %p81, %p82
      %s85 = sadd.s32 %s84, 1
      %p88 = scmp.eq.s32.totalorder %s24, 1
      %p89 = scmp.ne.s32.totalorder %s84, %s86
      %p90 = scmp.eq.s32.totalorder %s24, 0
      %p91 = por %p89, %p90
      %p92 = scmp.ne.s32.totalorder %s84, %s86
      %p93 = scmp.eq.s32.totalorder %s29, 1
      %p94 = por %p92, %p93
      %p95 = scmp.ne.s32.totalorder %s86, %s87
      %p96 = scmp.eq.s32.totalorder %s29, 0
      %p97 = por %p95, %p96
      %p98 = scmp.ne.s32.totalorder %s86, %s87
      %p99 = scmp.eq.s32.totalorder %s30, 1
      %p100 = por %p98, %p99
      %p102 = scmp.ne.s32.totalorder %s87, %s101
      %p103 = scmp.eq.s32.totalorder %s30, 0
      %p104 = por %p102, %p103
      %s106 = sadd.s32 %s105, 1
      %p109 = scmp.eq.s32.totalorder %s24, 1
      %p110 = scmp.ne.s32.totalorder %s105, %s107
      %p111 = scmp.eq.s32.totalorder %s24, 0
      %p112 = por %p110, %p111
      %p113 = scmp.ne.s32.totalorder %s105, %s107
      %p114 = scmp.eq.s32.totalorder %s29, 1
      %p115 = por %p113, %p114
      %p116 = scmp.ne.s32.totalorder %s107, %s108
      %p117 = scmp.eq.s32.totalorder %s29, 0
      %p118 = por %p116, %p117
      %p119 = scmp.ne.s32.totalorder %s107, %s108
      %p120 = scmp.eq.s32.totalorder %s30, 1
      %p121 = por %p119, %p120
      %p123 = scmp.ne.s32.totalorder %s108, %s122
      %p124 = scmp.eq.s32.totalorder %s30, 0
      %p125 = por %p123, %p124
      %s127 = sadd.s32 %s126, 1
      %p130 = scmp.eq.s32.totalorder %s24, 1
      %p131 = scmp.ne.s32.totalorder %s126, %s128
      %p132 = scmp.eq.s32.totalorder %s24, 0
      %p133 = por %p131, %p132
      %p134 = scmp.ne.s32.totalorder %s126, %s128
      %p135 = scmp.eq.s32.totalorder %s29, 1
      %p136 = por %p134, %p135
      %p137 = scmp.ne.s32.totalorder %s128, %s129
      %p138 = scmp.eq.s32.totalorder %s29, 0
      %p139 = por %p137, %p138
      %p140 = scmp.ne.s32.totalorder %s128, %s129
      %p141 = scmp.eq.s32.totalorder %s30, 1
      %p142 = por %p140, %p141
      %p144 = scmp.ne.s32.totalorder %s129, %s143
      %p145 = scmp.eq.s32.totalorder %s30, 0
      %p146 = por %p144, %p145
      %s148 = sadd.s32 %s147, 1
      %p151 = scmp.eq.s32.totalorder %s24, 1
      %p152 = scmp.ne.s32.totalorder %s147, %s149
      %p153 = scmp.eq.s32.totalorder %s24, 0
      %p154 = por %p152, %p153
      %p155 = scmp.ne.s32.totalorder %s147, %s149
      %p156 = scmp.eq.s32.totalorder %s29, 1
      %p157 = por %p155, %p156
      %p158 = scmp.ne.s32.totalorder %s149, %s150
      %p159 = scmp.eq.s32.totalorder %s29, 0
      %p160 = por %p158, %p159
      %p161 = scmp.ne.s32.totalorder %s149, %s150
      %p162 = scmp.eq.s32.totalorder %s30, 1
      %p163 = por %p161, %p162
      %p165 = scmp.ne.s32.totalorder %s150, %s164
      %p166 = scmp.eq.s32.totalorder %s30, 0
      %p167 = por %p165, %p166
      %s169 = sadd.s32 %s168, 1
      %p172 = scmp.eq.s32.totalorder %s24, 1
      %p173 = scmp.ne.s32.totalorder %s168, %s170
      %p174 = scmp.eq.s32.totalorder %s24, 0
      %p175 = por %p173, %p174
      %p176 = scmp.ne.s32.totalorder %s168, %s170
      %p177 = scmp.eq.s32.totalorder %s29, 1
      %p178 = por %p176, %p177
      %p179 = scmp.ne.s32.totalorder %s170, %s171
      %p180 = scmp.eq.s32.totalorder %s29, 0
      %p181 = por %p179, %p180
      %p182 = scmp.ne.s32.totalorder %s170, %s171
      %p183 = scmp.eq.s32.totalorder %s30, 1
      %p184 = por %p182, %p183
      %p186 = scmp.ne.s32.totalorder %s171, %s185
      %p187 = scmp.eq.s32.totalorder %s30, 0
      %p188 = por %p186, %p187
      %s190 = sadd.s32 %s189, 1
      %p193 = scmp.eq.s32.totalorder %s24, 1
      %p194 = scmp.ne.s32.totalorder %s189, %s191
      %p195 = scmp.eq.s32.totalorder %s24, 0
      %p196 = por %p194, %p195
      %p197 = scmp.ne.s32.totalorder %s189, %s191
      %p198 = scmp.eq.s32.totalorder %s29, 1
      %p199 = por %p197, %p198
      %p200 = scmp.ne.s32.totalorder %s191, %s192
      %p201 = scmp.eq.s32.totalorder %s29, 0
      %p202 = por %p200, %p201
      %p203 = scmp.ne.s32.totalorder %s191, %s192
      %p204 = scmp.eq.s32.totalorder %s30, 1
      %p205 = por %p203, %p204
      %p207 = scmp.ne.s32.totalorder %s192, %s206
      %p208 = scmp.eq.s32.totalorder %s30, 0
      %p209 = por %p207, %p208
      %s211 = sadd.s32 %s210, 1
      %p214 = scmp.eq.s32.totalorder %s24, 1
      %p215 = scmp.ne.s32.totalorder %s210, %s212
      %p216 = scmp.eq.s32.totalorder %s24, 0
      %p217 = por %p215, %p216
      %p218 = scmp.ne.s32.totalorder %s210, %s212
      %p219 = scmp.eq.s32.totalorder %s29, 1
      %p220 = por %p218, %p219
      %p221 = scmp.ne.s32.totalorder %s212, %s213
      %p222 = scmp.eq.s32.totalorder %s29, 0
      %p223 = por %p221, %p222
      %p224 = scmp.ne.s32.totalorder %s212, %s213
      %p225 = scmp.eq.s32.totalorder %s30, 1
      %p226 = por %p224, %p225
      %p228 = scmp.ne.s32.totalorder %s213, %s227
      %p229 = scmp.eq.s32.totalorder %s30, 0
      %p230 = por %p228, %p229
      %s232 = sadd.s32 %s231, 1
      %p235 = scmp.eq.s32.totalorder %s24, 1
      %p236 = scmp.ne.s32.totalorder %s231, %s233
      %p237 = scmp.eq.s32.totalorder %s24, 0
      %p238 = por %p236, %p237
      %p239 = scmp.ne.s32.totalorder %s231, %s233
      %p240 = scmp.eq.s32.totalorder %s29, 1
      %p241 = por %p239, %p240
      %p242 = scmp.ne.s32.totalorder %s233, %s234
      %p243 = scmp.eq.s32.totalorder %s29, 0
      %p244 = por %p242, %p243
      %p245 = scmp.ne.s32.totalorder %s233, %s234
      %p246 = scmp.eq.s32.totalorder %s30, 1
      %p247 = por %p245, %p246
      %p249 = scmp.ne.s32.totalorder %s234, %s248
      %p250 = scmp.eq.s32.totalorder %s30, 0
      %p251 = por %p249, %p250
      %s252 = ssub.s32 %s24, %s31
      %p253 = scmp.eq.s32.totalorder %s252, 0
      %s255 = sadd.s32 %s254, 1
      %s256 = scalar_select %p253, %s254, %s255
      %p259 = pneg %p253
      %p260 = scmp.eq.s32.totalorder %s24, 1
      %p261 = por %p259, %p260
      %p262 = scmp.ne.s32.totalorder %s254, %s257
      %p263 = scmp.eq.s32.totalorder %s24, 0
      %p264 = por %p262, %p263
      %p265 = scmp.ne.s32.totalorder %s254, %s257
      %p266 = scmp.eq.s32.totalorder %s29, 1
      %p267 = por %p265, %p266
      %p268 = scmp.ne.s32.totalorder %s257, %s258
      %p269 = scmp.eq.s32.totalorder %s29, 0
      %p270 = por %p268, %p269
      %p271 = scmp.ne.s32.totalorder %s257, %s258
      %p272 = scmp.eq.s32.totalorder %s30, 1
      %p273 = por %p271, %p272
      %p275 = scmp.ne.s32.totalorder %s258, %s274
      %p276 = scmp.eq.s32.totalorder %s30, 0
      %p277 = por %p275, %p276
      %s278 = ssub.s32 %s24, %s31
      %p279 = scmp.eq.s32.totalorder %s278, 0
      %s281 = sadd.s32 %s280, 1
      %s282 = scalar_select %p279, %s280, %s281
      %p285 = pneg %p279
      %p286 = scmp.eq.s32.totalorder %s24, 1
      %p287 = por %p285, %p286
      %p288 = scmp.ne.s32.totalorder %s280, %s283
      %p289 = scmp.eq.s32.totalorder %s24, 0
      %p290 = por %p288, %p289
      %p291 = scmp.ne.s32.totalorder %s280, %s283
      %p292 = scmp.eq.s32.totalorder %s29, 1
      %p293 = por %p291, %p292
      %p294 = scmp.ne.s32.totalorder %s283, %s284
      %p295 = scmp.eq.s32.totalorder %s29, 0
      %p296 = por %p294, %p295
      %p297 = scmp.ne.s32.totalorder %s283, %s284
      %p298 = scmp.eq.s32.totalorder %s30, 1
      %p299 = por %p297, %p298
      %p301 = scmp.ne.s32.totalorder %s284, %s300
      %p302 = scmp.eq.s32.totalorder %s30, 0
      %p303 = por %p301, %p302
      %p304 = scmp.le.s32.totalorder 1, %s24
      %p305 = scmp.lt.s32.totalorder %s24, 3
      %p306 = pnand %p304, %p305
      %p307 = pneg %p306
      // Predicated region
      $region9: #{tpu_custom_call.1} parent=5 // pred_check
        _
      $region10: #{tpu_custom_call.1} parent=5 // pred_check_branch
        %309 = sbr.rel (%p306) target = $region12
      $region11: #{tpu_custom_call.1} parent=5 // pred_region
        %s310 = ssub.s32 %s24, 1
        // Predicated region
        $region13: #{tpu_custom_call.1} parent=11 // pred_check
          %p311 = pneg %p97
        $region14: #{tpu_custom_call.1} parent=11 // pred_check_branch
          %313 = sbr.rel (%p311) target = $region16
        $region15: #{tpu_custom_call.1} parent=11 // pred_region
          _
        $region16: #{tpu_custom_call.1} parent=11 // pred_fallthru
          _
        // Predicated region
        $region17: #{tpu_custom_call.1} parent=11 // pred_check
          %p314 = pneg %p118
        $region18: #{tpu_custom_call.1} parent=11 // pred_check_branch
          %316 = sbr.rel (%p314) target = $region20
        $region19: #{tpu_custom_call.1} parent=11 // pred_region
          _
        $region20: #{tpu_custom_call.1} parent=11 // pred_fallthru
          _
        // Predicated region
        $region21: #{tpu_custom_call.1} parent=11 // pred_check
          %p317 = pneg %p139
        $region22: #{tpu_custom_call.1} parent=11 // pred_check_branch
          %319 = sbr.rel (%p317) target = $region24
        $region23: #{tpu_custom_call.1} parent=11 // pred_region
          _
        $region24: #{tpu_custom_call.1} parent=11 // pred_fallthru
          _
        // Predicated region
        $region25: #{tpu_custom_call.1} parent=11 // pred_check
          %p320 = pneg %p160
        $region26: #{tpu_custom_call.1} parent=11 // pred_check_branch
          %322 = sbr.rel (%p320) target = $region28
        $region27: #{tpu_custom_call.1} parent=11 // pred_region
          _
        $region28: #{tpu_custom_call.1} parent=11 // pred_fallthru
          _
        // Predicated region
        $region29: #{tpu_custom_call.1} parent=11 // pred_check
          %p323 = pneg %p181
        $region30: #{tpu_custom_call.1} parent=11 // pred_check_branch
          %325 = sbr.rel (%p323) target = $region32
        $region31: #{tpu_custom_call.1} parent=11 // pred_region
          _
        $region32: #{tpu_custom_call.1} parent=11 // pred_fallthru
          _
        // Predicated region
        $region33: #{tpu_custom_call.1} parent=11 // pred_check
          %p326 = pneg %p202
        $region34: #{tpu_custom_call.1} parent=11 // pred_check_branch
          %328 = sbr.rel (%p326) target = $region36
        $region35: #{tpu_custom_call.1} parent=11 // pred_region
          _
        $region36: #{tpu_custom_call.1} parent=11 // pred_fallthru
          _
        // Predicated region
        $region37: #{tpu_custom_call.1} parent=11 // pred_check
          %p329 = pneg %p223
        $region38: #{tpu_custom_call.1} parent=11 // pred_check_branch
          %331 = sbr.rel (%p329) target = $region40
        $region39: #{tpu_custom_call.1} parent=11 // pred_region
          _
        $region40: #{tpu_custom_call.1} parent=11 // pred_fallthru
          _
        // Predicated region
        $region41: #{tpu_custom_call.1} parent=11 // pred_check
          %p332 = pneg %p244
        $region42: #{tpu_custom_call.1} parent=11 // pred_check_branch
          %334 = sbr.rel (%p332) target = $region44
        $region43: #{tpu_custom_call.1} parent=11 // pred_region
          _
        $region44: #{tpu_custom_call.1} parent=11 // pred_fallthru
          _
      $region12: #{tpu_custom_call.1} parent=5 // pred_fallthru
        _
      %p335 = scmp.lt.s32.totalorder %s24, 2
      // Predicated region
      $region45: #{tpu_custom_call.1} parent=5 // pred_check
        %p336 = pneg %p335
      $region46: #{tpu_custom_call.1} parent=5 // pred_check_branch
        %338 = sbr.rel (%p336) target = $region48
      $region47: #{tpu_custom_call.1} parent=5 // pred_region
        // Predicated region
        $region49: #{tpu_custom_call.1} parent=47 // pred_check
          %p339 = pneg %p44
        $region50: #{tpu_custom_call.1} parent=47 // pred_check_branch
          %341 = sbr.rel (%p339) target = $region52
        $region51: #{tpu_custom_call.1} parent=47 // pred_region
          %p342 = scmp.lt.s32.totalorder %s24, 1
          %s343 = scalar_select %p342, %s24, 1
          %s344 = smul.addr %s343, 8
          %s345 = scalar_lea.vmem %s0, %s344
        $region52: #{tpu_custom_call.1} parent=47 // pred_fallthru
          _
        // Predicated region
        $region53: #{tpu_custom_call.1} parent=47 // pred_check
          %p346 = pneg %p70
        $region54: #{tpu_custom_call.1} parent=47 // pred_check_branch
          %348 = sbr.rel (%p346) target = $region56
        $region55: #{tpu_custom_call.1} parent=47 // pred_region
          %p349 = scmp.lt.s32.totalorder %s24, 1
          %s350 = scalar_select %p349, %s24, 1
          %s351 = scalar_lea.vmem %s1, %s350
        $region56: #{tpu_custom_call.1} parent=47 // pred_fallthru
          _
      $region48: #{tpu_custom_call.1} parent=5 // pred_fallthru
        _
      %p352 = scmp.le.s32.totalorder 1, %s24
      %p353 = scmp.lt.s32.totalorder %s24, 3
      %p354 = pnand %p352, %p353
      %p355 = pneg %p354
      // Predicated region
      $region57: #{tpu_custom_call.1} parent=5 // pred_check
        _
      $region58: #{tpu_custom_call.1} parent=5 // pred_check_branch
        %357 = sbr.rel (%p354) target = $region60
      $region59: #{tpu_custom_call.1} parent=5 // pred_region
        %s358 = ssub.s32 %s24, 1
        %p359 = scmp.lt.s32.totalorder %s29, 1
        %s360 = scalar_select %p359, %s29, 1
        %s361 = smul.addr %s360, 8
        %s362 = scalar_lea.vmem %s0, %s361
        %p363 = pneg %p50
        %p364 = pneg %p47
        %p365 = scmp.lt.s32.totalorder %s29, 1
        %s366 = scalar_select %p365, %s29, 1
        %s367 = scalar_lea.vmem %s1, %s366
        %p368 = pneg %p76
        %p369 = pneg %p73
        %p370 = pneg %p97
        %p371 = pneg %p94
        %p372 = pneg %p118
        %p373 = pneg %p115
        %p374 = pneg %p139
        %p375 = pneg %p136
        %p376 = pneg %p160
        %p377 = pneg %p157
        %p378 = pneg %p181
        %p379 = pneg %p178
        %p380 = pneg %p202
        %p381 = pneg %p199
        %p382 = pneg %p223
        %p383 = pneg %p220
        %p384 = pneg %p244
        %p385 = pneg %p241
        %p386 = pneg %p270
        %p387 = pneg %p267
        %s388 = sand.u32 %s257, 1
        %s389 = scalar_lea.sflag [#allocation3], %s388
        %s390 = sand.u32 %s257, 1
        %s391 = scalar_lea.vmem [#allocation2], %s390
        %p392 = pneg %p296
        %p393 = pneg %p293
        %s394 = sand.u32 %s283, 1
        %s395 = scalar_lea.sflag [#allocation5], %s394
        %s396 = sand.u32 %s283, 1
        %s397 = smul.addr %s396, 8
        %s398 = scalar_lea.vmem [#allocation4], %s397
        %p399 = scmp.lt.s32.totalorder %s29, 1
        %s400 = scalar_select %p399, %s29, 1
        %s401 = smul.addr %s400, 8
        %s402 = scalar_lea.vmem %s0, %s401
        %p403 = scmp.lt.s32.totalorder %s29, 1
        %s404 = scalar_select %p403, %s29, 1
        %s405 = scalar_lea.vmem %s1, %s404
        %v406 = vld [vmem:[%s402] sm:$0xff]
        %v407 = vld [vmem:[%s2] sm:$0xf]
        %v408 = vld [vmem:[%s3] sm:$0x1]
        %v410 = vlaneseq
        %v411 = vshrl.u32 %v410, 7
        %v412 = vsub.s32 0, %v411
        %v413 = vrot.slane %v408, %v412
        %vm415 = vcmask 31744
        %v417 = vsel %vm415, %v406, 0
        %vm419 = vcmask 1043456
        %v421 = vsel %vm419, %v407, 0
        %423 = vmatprep.subr.mxu0 0.0
        %424 = vmatpush1.msra.mxu0 %v421
        %425 = vmatprep.subr.mxu0 0.0
        %426 = vmatpush1.msra.mxu0 0.0
        %427 = vmatprep.subr.mxu0 0.0
        %428 = vmatpush1.msra.mxu0 0.0
        %429 = vmatprep.subr.mxu0 0.0
        %430 = vmatpush1.msra.mxu0 0.0
        %431 = vmatprep.subr.mxu0 0.0
        %432 = vmatpush1.msra.mxu0 0.0
        %433 = vmatprep.subr.mxu0 0.0
        %434 = vmatpush1.msra.mxu0 0.0
        %435 = vmatprep.subr.mxu0 0.0
        %436 = vmatpush1.msra.mxu0 0.0
        %437 = vmatprep.subr.mxu0 0.0
        %438 = vmatpush1.msra.mxu0 0.0
        %439 = vmatprep.subr.mxu0 0.0
        %440 = vmatpush1.msra.mxu0 0.0
        %441 = vmatprep.subr.mxu0 0.0
        %442 = vmatpush1.msra.mxu0 0.0
        %443 = vmatprep.subr.mxu0 0.0
        %444 = vmatpush1.msra.mxu0 0.0
        %445 = vmatprep.subr.mxu0 0.0
        %446 = vmatpush1.msra.mxu0 0.0
        %447 = vmatprep.subr.mxu0 0.0
        %448 = vmatpush1.msra.mxu0 0.0
        %449 = vmatprep.subr.mxu0 0.0
        %450 = vmatpush1.msra.mxu0 0.0
        %451 = vmatprep.subr.mxu0 0.0
        %452 = vmatpush1.msra.mxu0 0.0
        %453 = vmatprep.subr.mxu0 0.0
        %454 = vmatpush1.msra.mxu0 0.0
        %455 = vmatprep.subr.mxu0 0.0
        %456 = vmatpush1.msra.mxu0 0.0
        %457 = vmatprep.subr.mxu0 0.0
        %458 = vmatpush1.msra.mxu0 0.0
        %459 = vmatprep.subr.mxu0 0.0
        %460 = vmatpush1.msra.mxu0 0.0
        %461 = vmatprep.subr.mxu0 0.0
        %462 = vmatpush1.msra.mxu0 0.0
        %463 = vmatprep.subr.mxu0 0.0
        %464 = vmatpush1.msra.mxu0 0.0
        %465 = vmatprep.subr.mxu0 0.0
        %466 = vmatpush1.msra.mxu0 0.0
        %467 = vmatprep.subr.mxu0 0.0
        %468 = vmatpush1.msra.mxu0 0.0
        %469 = vmatprep.subr.mxu0 0.0
        %470 = vmatpush1.msra.mxu0 0.0
        %471 = vmatprep.subr.mxu0 0.0
        %472 = vmatpush1.msra.mxu0 0.0
        %473 = vmatprep.subr.mxu0 0.0
        %474 = vmatpush1.msra.mxu0 0.0
        %475 = vmatprep.subr.mxu0 0.0
        %476 = vmatpush1.msra.mxu0 0.0
        %477 = vmatprep.subr.mxu0 0.0
        %478 = vmatpush1.msra.mxu0 0.0
        %479 = vmatprep.subr.mxu0 0.0
        %480 = vmatpush1.msra.mxu0 0.0
        %481 = vmatprep.subr.mxu0 0.0
        %482 = vmatpush1.msra.mxu0 0.0
        %483 = vmatprep.subr.mxu0 0.0
        %484 = vmatpush1.msra.mxu0 0.0
        %485 = vmatprep.subr.mxu0 0.0
        %486 = vmatpush1.msra.mxu0 0.0
        %487 = vmatprep.mubr.f32.mxu0 0.0
        %488 = vmatmul.mubr.f32.gmra.mrb[0].mxu0 %v417
        %v489 = vpop.f32.mrb[0].mxu0
        %v490 = vadd.f32 %v413, %v489
        %v491 = vpop.f32.mrb[0].mxu0
        %492 = vdwg.mxu0
        %v493 = vtanh.pop %v490
        %v494 = vld [vmem:[%s4] sm:$0xff]
        %vm495 = vcmask 64512
        %v497 = vsel %vm495, %v493, 0
        %499 = vmatprep.subr.mxu0 0.0
        %500 = vmatpush1.msra.mxu0 %v494
        %501 = vmatprep.subr.mxu0 0.0
        %502 = vmatpush1.msra.mxu0 0.0
        %503 = vmatprep.subr.mxu0 0.0
        %504 = vmatpush1.msra.mxu0 0.0
        %505 = vmatprep.subr.mxu0 0.0
        %506 = vmatpush1.msra.mxu0 0.0
        %507 = vmatprep.subr.mxu0 0.0
        %508 = vmatpush1.msra.mxu0 0.0
        %509 = vmatprep.subr.mxu0 0.0
        %510 = vmatpush1.msra.mxu0 0.0
        %511 = vmatprep.subr.mxu0 0.0
        %512 = vmatpush1.msra.mxu0 0.0
        %513 = vmatprep.subr.mxu0 0.0
        %514 = vmatpush1.msra.mxu0 0.0
        %515 = vmatprep.subr.mxu0 0.0
        %516 = vmatpush1.msra.mxu0 0.0
        %517 = vmatprep.subr.mxu0 0.0
        %518 = vmatpush1.msra.mxu0 0.0
        %519 = vmatprep.subr.mxu0 0.0
        %520 = vmatpush1.msra.mxu0 0.0
        %521 = vmatprep.subr.mxu0 0.0
        %522 = vmatpush1.msra.mxu0 0.0
        %523 = vmatprep.subr.mxu0 0.0
        %524 = vmatpush1.msra.mxu0 0.0
        %525 = vmatprep.subr.mxu0 0.0
        %526 = vmatpush1.msra.mxu0 0.0
        %527 = vmatprep.subr.mxu0 0.0
        %528 = vmatpush1.msra.mxu0 0.0
        %529 = vmatprep.subr.mxu0 0.0
        %530 = vmatpush1.msra.mxu0 0.0
        %531 = vmatprep.subr.mxu0 0.0
        %532 = vmatpush1.msra.mxu0 0.0
        %533 = vmatprep.subr.mxu0 0.0
        %534 = vmatpush1.msra.mxu0 0.0
        %535 = vmatprep.subr.mxu0 0.0
        %536 = vmatpush1.msra.mxu0 0.0
        %537 = vmatprep.subr.mxu0 0.0
        %538 = vmatpush1.msra.mxu0 0.0
        %539 = vmatprep.subr.mxu0 0.0
        %540 = vmatpush1.msra.mxu0 0.0
        %541 = vmatprep.subr.mxu0 0.0
        %542 = vmatpush1.msra.mxu0 0.0
        %543 = vmatprep.subr.mxu0 0.0
        %544 = vmatpush1.msra.mxu0 0.0
        %545 = vmatprep.subr.mxu0 0.0
        %546 = vmatpush1.msra.mxu0 0.0
        %547 = vmatprep.subr.mxu0 0.0
        %548 = vmatpush1.msra.mxu0 0.0
        %549 = vmatprep.subr.mxu0 0.0
        %550 = vmatpush1.msra.mxu0 0.0
        %551 = vmatprep.subr.mxu0 0.0
        %552 = vmatpush1.msra.mxu0 0.0
        %553 = vmatprep.subr.mxu0 0.0
        %554 = vmatpush1.msra.mxu0 0.0
        %555 = vmatprep.subr.mxu0 0.0
        %556 = vmatpush1.msra.mxu0 0.0
        %557 = vmatprep.subr.mxu0 0.0
        %558 = vmatpush1.msra.mxu0 0.0
        %559 = vmatprep.subr.mxu0 0.0
        %560 = vmatpush1.msra.mxu0 0.0
        %561 = vmatprep.subr.mxu0 0.0
        %562 = vmatpush1.msra.mxu0 0.0
        %563 = vmatprep.mubr.f32.mxu0 0.0
        %564 = vmatmul.mubr.f32.gmra.mrb[0].mxu0 %v497
        %v565 = vpop.f32.mrb[0].mxu0
        %v566 = vadd.f32 0.0, %v565
        %v567 = vpop.f32.mrb[0].mxu0
        %568 = vdwg.mxu0
        %v569 = vsel %vm495, %v566, -inf
        %570 = vmax.xlane.f32.xlu0 %v569
        %v571 = vpop.xlane.xlu0 %570
        %v572 = vsub.f32 %v566, %v571
        %v573 = vmul.f32 %v572, 1.442695
        %v574 = vpow.pop %v573
        %v575 = vsel %vm495, %v574, 0.0
        %576 = vadd.xlane.f32.xlu0 %v575
        %v577 = vpop.xlane.xlu0 %576
        %v578 = vrcp.pop %v577
        %v579 = vmul.f32 %v574, %v578
        %v581 = vsel %vm495, %v579, 0
        %583 = vmatprep.subr.mxu0 0.0
        %584 = vmatpush1.msra.mxu0 %v406
        %585 = vmatprep.subr.mxu0 0.0
        %586 = vmatpush1.msra.mxu0 0.0
        %587 = vmatprep.subr.mxu0 0.0
        %588 = vmatpush1.msra.mxu0 0.0
        %589 = vmatprep.subr.mxu0 0.0
        %590 = vmatpush1.msra.mxu0 0.0
        %591 = vmatprep.subr.mxu0 0.0
        %592 = vmatpush1.msra.mxu0 0.0
        %593 = vmatprep.subr.mxu0 0.0
        %594 = vmatpush1.msra.mxu0 0.0
        %595 = vmatprep.subr.mxu0 0.0
        %596 = vmatpush1.msra.mxu0 0.0
        %597 = vmatprep.subr.mxu0 0.0
        %598 = vmatpush1.msra.mxu0 0.0
        %599 = vmatprep.subr.mxu0 0.0
        %600 = vmatpush1.msra.mxu0 0.0
        %601 = vmatprep.subr.mxu0 0.0
        %602 = vmatpush1.msra.mxu0 0.0
        %603 = vmatprep.subr.mxu0 0.0
        %604 = vmatpush1.msra.mxu0 0.0
        %605 = vmatprep.subr.mxu0 0.0
        %606 = vmatpush1.msra.mxu0 0.0
        %607 = vmatprep.subr.mxu0 0.0
        %608 = vmatpush1.msra.mxu0 0.0
        %609 = vmatprep.subr.mxu0 0.0
        %610 = vmatpush1.msra.mxu0 0.0
        %611 = vmatprep.subr.mxu0 0.0
        %612 = vmatpush1.msra.mxu0 0.0
        %613 = vmatprep.subr.mxu0 0.0
        %614 = vmatpush1.msra.mxu0 0.0
        %615 = vmatprep.subr.mxu0 0.0
        %616 = vmatpush1.msra.mxu0 0.0
        %617 = vmatprep.subr.mxu0 0.0
        %618 = vmatpush1.msra.mxu0 0.0
        %619 = vmatprep.subr.mxu0 0.0
        %620 = vmatpush1.msra.mxu0 0.0
        %621 = vmatprep.subr.mxu0 0.0
        %622 = vmatpush1.msra.mxu0 0.0
        %623 = vmatprep.subr.mxu0 0.0
        %624 = vmatpush1.msra.mxu0 0.0
        %625 = vmatprep.subr.mxu0 0.0
        %626 = vmatpush1.msra.mxu0 0.0
        %627 = vmatprep.subr.mxu0 0.0
        %628 = vmatpush1.msra.mxu0 0.0
        %629 = vmatprep.subr.mxu0 0.0
        %630 = vmatpush1.msra.mxu0 0.0
        %631 = vmatprep.subr.mxu0 0.0
        %632 = vmatpush1.msra.mxu0 0.0
        %633 = vmatprep.subr.mxu0 0.0
        %634 = vmatpush1.msra.mxu0 0.0
        %635 = vmatprep.subr.mxu0 0.0
        %636 = vmatpush1.msra.mxu0 0.0
        %637 = vmatprep.subr.mxu0 0.0
        %638 = vmatpush1.msra.mxu0 0.0
        %639 = vmatprep.subr.mxu0 0.0
        %640 = vmatpush1.msra.mxu0 0.0
        %641 = vmatprep.subr.mxu0 0.0
        %642 = vmatpush1.msra.mxu0 0.0
        %643 = vmatprep.subr.mxu0 0.0
        %644 = vmatpush1.msra.mxu0 0.0
        %645 = vmatprep.subr.mxu0 0.0
        %646 = vmatpush1.msra.mxu0 0.0
        %647 = vmatprep.mubr.f32.mxu0 0.0
        %648 = vmatmul.mubr.f32.gmra.mrb[0].mxu0 %v581
        %v649 = vpop.f32.mrb[0].mxu0
        %v650 = vadd.f32 0.0, %v649
        %v651 = vpop.f32.mrb[0].mxu0
        %652 = vdwg.mxu0
        %v653 = vld [vmem:[%s5] sm:$0xf]
        %v654 = vld [vmem:[%s7] sm:$0x1]
        %v656 = vlaneseq
        %v657 = vshrl.u32 %v656, 7
        %v658 = vsub.s32 0, %v657
        %v659 = vrot.slane %v654, %v658
        %v662 = vsel %vm415, %v650, 0
        %v665 = vsel %vm419, %v653, 0
        %667 = vmatprep.subr.mxu0 0.0
        %668 = vmatpush1.msra.mxu0 %v665
        %669 = vmatprep.subr.mxu0 0.0
        %670 = vmatpush1.msra.mxu0 0.0
        %671 = vmatprep.subr.mxu0 0.0
        %672 = vmatpush1.msra.mxu0 0.0
        %673 = vmatprep.subr.mxu0 0.0
        %674 = vmatpush1.msra.mxu0 0.0
        %675 = vmatprep.subr.mxu0 0.0
        %676 = vmatpush1.msra.mxu0 0.0
        %677 = vmatprep.subr.mxu0 0.0
        %678 = vmatpush1.msra.mxu0 0.0
        %679 = vmatprep.subr.mxu0 0.0
        %680 = vmatpush1.msra.mxu0 0.0
        %681 = vmatprep.subr.mxu0 0.0
        %682 = vmatpush1.msra.mxu0 0.0
        %683 = vmatprep.subr.mxu0 0.0
        %684 = vmatpush1.msra.mxu0 0.0
        %685 = vmatprep.subr.mxu0 0.0
        %686 = vmatpush1.msra.mxu0 0.0
        %687 = vmatprep.subr.mxu0 0.0
        %688 = vmatpush1.msra.mxu0 0.0
        %689 = vmatprep.subr.mxu0 0.0
        %690 = vmatpush1.msra.mxu0 0.0
        %691 = vmatprep.subr.mxu0 0.0
        %692 = vmatpush1.msra.mxu0 0.0
        %693 = vmatprep.subr.mxu0 0.0
        %694 = vmatpush1.msra.mxu0 0.0
        %695 = vmatprep.subr.mxu0 0.0
        %696 = vmatpush1.msra.mxu0 0.0
        %697 = vmatprep.subr.mxu0 0.0
        %698 = vmatpush1.msra.mxu0 0.0
        %699 = vmatprep.subr.mxu0 0.0
        %700 = vmatpush1.msra.mxu0 0.0
        %701 = vmatprep.subr.mxu0 0.0
        %702 = vmatpush1.msra.mxu0 0.0
        %703 = vmatprep.subr.mxu0 0.0
        %704 = vmatpush1.msra.mxu0 0.0
        %705 = vmatprep.subr.mxu0 0.0
        %706 = vmatpush1.msra.mxu0 0.0
        %707 = vmatprep.subr.mxu0 0.0
        %708 = vmatpush1.msra.mxu0 0.0
        %709 = vmatprep.subr.mxu0 0.0
        %710 = vmatpush1.msra.mxu0 0.0
        %711 = vmatprep.subr.mxu0 0.0
        %712 = vmatpush1.msra.mxu0 0.0
        %713 = vmatprep.subr.mxu0 0.0
        %714 = vmatpush1.msra.mxu0 0.0
        %715 = vmatprep.subr.mxu0 0.0
        %716 = vmatpush1.msra.mxu0 0.0
        %717 = vmatprep.subr.mxu0 0.0
        %718 = vmatpush1.msra.mxu0 0.0
        %719 = vmatprep.subr.mxu0 0.0
        %720 = vmatpush1.msra.mxu0 0.0
        %721 = vmatprep.subr.mxu0 0.0
        %722 = vmatpush1.msra.mxu0 0.0
        %723 = vmatprep.subr.mxu0 0.0
        %724 = vmatpush1.msra.mxu0 0.0
        %725 = vmatprep.subr.mxu0 0.0
        %726 = vmatpush1.msra.mxu0 0.0
        %727 = vmatprep.subr.mxu0 0.0
        %728 = vmatpush1.msra.mxu0 0.0
        %729 = vmatprep.subr.mxu0 0.0
        %730 = vmatpush1.msra.mxu0 0.0
        %731 = vmatprep.mubr.f32.mxu0 0.0
        %732 = vmatmul.mubr.f32.gmra.mrb[0].mxu0 %v662
        %v733 = vpop.f32.mrb[0].mxu0
        %v734 = vadd.f32 %v659, %v733
        %v735 = vpop.f32.mrb[0].mxu0
        %736 = vdwg.mxu0
        %v737 = vld [vmem:[%s6] sm:$0xff]
        %v738 = vld [vmem:[%s6 + $0x8] sm:$0xff]
        %v739 = vld [vmem:[%s6 + $0x10] sm:$0xff]
        %v740 = vld [vmem:[%s6 + $0x18] sm:$0xff]
        %v741 = vld [vmem:[%s6 + $0x20] sm:$0xf]
        %v742 = vld [vmem:[%s8] sm:$0xff]
        %v743 = vld [vmem:[%s8 + $0x8] sm:$0xff]
        %v744 = vld [vmem:[%s8 + $0x10] sm:$0xff]
        %v745 = vld [vmem:[%s8 + $0x18] sm:$0xff]
        %v746 = vld [vmem:[%s9] sm:$0x1]
        %v747 = vld [vmem:[%s405] sm:$0x1]
        %v749 = vlaneseq
        %v750 = vshrl.u32 %v749, 7
        %v751 = vsub.s32 0, %v750
        %v752 = vrot.slane %v747, %v751
        %753 = vrot.lane.b32.xlu0 %v752, 32
        %v754 = vpop.permute.xlu0 %753
        %vm756 = vcmask 261120
        %v757 = vsel %vm756, 0.0, %v754
        %vm758 = vcmask 293888
        %v760 = vsel %vm758, %v757, 0
        %v763 = vsel %vm419, %v741, 0
        %765 = vmatprep.subr.mxu0 0.0
        %766 = vmatpush1.msra.mxu0 %v737
        %767 = vmatprep.subr.mxu0 0.0
        %768 = vmatpush1.msra.mxu0 %v738
        %769 = vmatprep.subr.mxu0 0.0
        %770 = vmatpush1.msra.mxu0 %v739
        %771 = vmatprep.subr.mxu0 0.0
        %772 = vmatpush1.msra.mxu0 %v740
        %773 = vmatprep.subr.mxu0 0.0
        %774 = vmatpush1.msra.mxu0 %v763
        %775 = vmatprep.subr.mxu0 0.0
        %776 = vmatpush1.msra.mxu0 0.0
        %777 = vmatprep.subr.mxu0 0.0
        %778 = vmatpush1.msra.mxu0 0.0
        %779 = vmatprep.subr.mxu0 0.0
        %780 = vmatpush1.msra.mxu0 0.0
        %781 = vmatprep.subr.mxu0 0.0
        %782 = vmatpush1.msra.mxu0 0.0
        %783 = vmatprep.subr.mxu0 0.0
        %784 = vmatpush1.msra.mxu0 0.0
        %785 = vmatprep.subr.mxu0 0.0
        %786 = vmatpush1.msra.mxu0 0.0
        %787 = vmatprep.subr.mxu0 0.0
        %788 = vmatpush1.msra.mxu0 0.0
        %789 = vmatprep.subr.mxu0 0.0
        %790 = vmatpush1.msra.mxu0 0.0
        %791 = vmatprep.subr.mxu0 0.0
        %792 = vmatpush1.msra.mxu0 0.0
        %793 = vmatprep.subr.mxu0 0.0
        %794 = vmatpush1.msra.mxu0 0.0
        %795 = vmatprep.subr.mxu0 0.0
        %796 = vmatpush1.msra.mxu0 0.0
        %797 = vmatprep.subr.mxu0 0.0
        %798 = vmatpush1.msra.mxu0 0.0
        %799 = vmatprep.subr.mxu0 0.0
        %800 = vmatpush1.msra.mxu0 0.0
        %801 = vmatprep.subr.mxu0 0.0
        %802 = vmatpush1.msra.mxu0 0.0
        %803 = vmatprep.subr.mxu0 0.0
        %804 = vmatpush1.msra.mxu0 0.0
        %805 = vmatprep.subr.mxu0 0.0
        %806 = vmatpush1.msra.mxu0 0.0
        %807 = vmatprep.subr.mxu0 0.0
        %808 = vmatpush1.msra.mxu0 0.0
        %809 = vmatprep.subr.mxu0 0.0
        %810 = vmatpush1.msra.mxu0 0.0
        %811 = vmatprep.subr.mxu0 0.0
        %812 = vmatpush1.msra.mxu0 0.0
        %813 = vmatprep.subr.mxu0 0.0
        %814 = vmatpush1.msra.mxu0 0.0
        %815 = vmatprep.subr.mxu0 0.0
        %816 = vmatpush1.msra.mxu0 0.0
        %817 = vmatprep.subr.mxu0 0.0
        %818 = vmatpush1.msra.mxu0 0.0
        %819 = vmatprep.subr.mxu0 0.0
        %820 = vmatpush1.msra.mxu0 0.0
        %821 = vmatprep.subr.mxu0 0.0
        %822 = vmatpush1.msra.mxu0 0.0
        %823 = vmatprep.subr.mxu0 0.0
        %824 = vmatpush1.msra.mxu0 0.0
        %825 = vmatprep.subr.mxu0 0.0
        %826 = vmatpush1.msra.mxu0 0.0
        %827 = vmatprep.subr.mxu0 0.0
        %828 = vmatpush1.msra.mxu0 0.0
        %829 = vmatprep.mubr.f32.mxu0 0.0
        %830 = vmatmul.mubr.f32.gmra.mrb[0].mxu0 %v760
        %v831 = vpop.f32.mrb[0].mxu0
        %v832 = vadd.f32 0.0, %v831
        %v833 = vpop.f32.mrb[0].mxu0
        %834 = vdwg.mxu0
        %v835 = vadd.f32 %v734, %v832
        %v836 = vxor.u32 %v835, 2147483648
        %v837 = vmul.f32 %v836, 1.442695
        %v838 = vpow.pop %v837
        %v839 = vadd.f32 %v838, 1.0
        %v840 = vrcp.pop %v839
        %v841 = vmul.f32 1.0, %v840
        %v842 = vtanh.pop %v835
        %v843 = vmul.f32 %v841, 0.0
        %845 = vrot.lane.b32.xlu0 %v842, 32
        %v846 = vpop.permute.xlu0 %845
        %v848 = vmul.f32 %v841, %v846
        %850 = vrot.lane.b32.xlu0 %v848, 32
        %v851 = vpop.permute.xlu0 %850
        %v853 = vadd.f32 %v843, %v851
        %v854 = vtanh.pop %v853
        %856 = vrot.lane.b32.xlu0 %v854, 32
        %v857 = vpop.permute.xlu0 %856
        %v859 = vmul.f32 %v841, %v857
        %861 = vrot.lane.b32.xlu0 %v859, 64
        %v862 = vpop.permute.xlu0 %861
        %vm864 = vcmask 253952
        %865 = vst.msk [vmem:[%s398] sm:$0x1] %vm864, %v862
        %v866 = vsel %vm756, %v862, 0
        %868 = vmatprep.subr.mxu0 0.0
        %869 = vmatpush1.msra.mxu0 %v742
        %870 = vmatprep.subr.mxu0 0.0
        %871 = vmatpush1.msra.mxu0 %v743
        %872 = vmatprep.subr.mxu0 0.0
        %873 = vmatpush1.msra.mxu0 %v744
        %874 = vmatprep.subr.mxu0 0.0
        %875 = vmatpush1.msra.mxu0 %v745
        %876 = vmatprep.subr.mxu0 0.0
        %877 = vmatpush1.msra.mxu0 0.0
        %878 = vmatprep.subr.mxu0 0.0
        %879 = vmatpush1.msra.mxu0 0.0
        %880 = vmatprep.subr.mxu0 0.0
        %881 = vmatpush1.msra.mxu0 0.0
        %882 = vmatprep.subr.mxu0 0.0
        %883 = vmatpush1.msra.mxu0 0.0
        %884 = vmatprep.subr.mxu0 0.0
        %885 = vmatpush1.msra.mxu0 0.0
        %886 = vmatprep.subr.mxu0 0.0
        %887 = vmatpush1.msra.mxu0 0.0
        %888 = vmatprep.subr.mxu0 0.0
        %889 = vmatpush1.msra.mxu0 0.0
        %890 = vmatprep.subr.mxu0 0.0
        %891 = vmatpush1.msra.mxu0 0.0
        %892 = vmatprep.subr.mxu0 0.0
        %893 = vmatpush1.msra.mxu0 0.0
        %894 = vmatprep.subr.mxu0 0.0
        %895 = vmatpush1.msra.mxu0 0.0
        %896 = vmatprep.subr.mxu0 0.0
        %897 = vmatpush1.msra.mxu0 0.0
        %898 = vmatprep.subr.mxu0 0.0
        %899 = vmatpush1.msra.mxu0 0.0
        %900 = vmatprep.subr.mxu0 0.0
        %901 = vmatpush1.msra.mxu0 0.0
        %902 = vmatprep.subr.mxu0 0.0
        %903 = vmatpush1.msra.mxu0 0.0
        %904 = vmatprep.subr.mxu0 0.0
        %905 = vmatpush1.msra.mxu0 0.0
        %906 = vmatprep.subr.mxu0 0.0
        %907 = vmatpush1.msra.mxu0 0.0
        %908 = vmatprep.subr.mxu0 0.0
        %909 = vmatpush1.msra.mxu0 0.0
        %910 = vmatprep.subr.mxu0 0.0
        %911 = vmatpush1.msra.mxu0 0.0
        %912 = vmatprep.subr.mxu0 0.0
        %913 = vmatpush1.msra.mxu0 0.0
        %914 = vmatprep.subr.mxu0 0.0
        %915 = vmatpush1.msra.mxu0 0.0
        %916 = vmatprep.subr.mxu0 0.0
        %917 = vmatpush1.msra.mxu0 0.0
        %918 = vmatprep.subr.mxu0 0.0
        %919 = vmatpush1.msra.mxu0 0.0
        %920 = vmatprep.subr.mxu0 0.0
        %921 = vmatpush1.msra.mxu0 0.0
        %922 = vmatprep.subr.mxu0 0.0
        %923 = vmatpush1.msra.mxu0 0.0
        %924 = vmatprep.subr.mxu0 0.0
        %925 = vmatpush1.msra.mxu0 0.0
        %926 = vmatprep.subr.mxu0 0.0
        %927 = vmatpush1.msra.mxu0 0.0
        %928 = vmatprep.subr.mxu0 0.0
        %929 = vmatpush1.msra.mxu0 0.0
        %930 = vmatprep.subr.mxu0 0.0
        %931 = vmatpush1.msra.mxu0 0.0
        %932 = vmatprep.mubr.f32.mxu0 0.0
        %933 = vmatmul.mubr.f32.gmra.mrb[0].mxu0 %v866
        %v934 = vpop.f32.mrb[0].mxu0
        %v935 = vadd.f32 %v746, %v934
        %v936 = vpop.f32.mrb[0].mxu0
        %937 = vdwg.mxu0
        %939 = vrot.lane.b32.xlu0 %v935, 32
        %v940 = vpop.permute.xlu0 %939
        %v942 = vsel %vm756, %v862, %v940
        %v944 = vsel %vm758, %v942, 0
        %946 = vmatprep.subr.mxu0 0.0
        %947 = vmatpush1.msra.mxu0 %v737
        %948 = vmatprep.subr.mxu0 0.0
        %949 = vmatpush1.msra.mxu0 %v738
        %950 = vmatprep.subr.mxu0 0.0
        %951 = vmatpush1.msra.mxu0 %v739
        %952 = vmatprep.subr.mxu0 0.0
        %953 = vmatpush1.msra.mxu0 %v740
        %954 = vmatprep.subr.mxu0 0.0
        %955 = vmatpush1.msra.mxu0 %v763
        %956 = vmatprep.subr.mxu0 0.0
        %957 = vmatpush1.msra.mxu0 0.0
        %958 = vmatprep.subr.mxu0 0.0
        %959 = vmatpush1.msra.mxu0 0.0
        %960 = vmatprep.subr.mxu0 0.0
        %961 = vmatpush1.msra.mxu0 0.0
        %962 = vmatprep.subr.mxu0 0.0
        %963 = vmatpush1.msra.mxu0 0.0
        %964 = vmatprep.subr.mxu0 0.0
        %965 = vmatpush1.msra.mxu0 0.0
        %966 = vmatprep.subr.mxu0 0.0
        %967 = vmatpush1.msra.mxu0 0.0
        %968 = vmatprep.subr.mxu0 0.0
        %969 = vmatpush1.msra.mxu0 0.0
        %970 = vmatprep.subr.mxu0 0.0
        %971 = vmatpush1.msra.mxu0 0.0
        %972 = vmatprep.subr.mxu0 0.0
        %973 = vmatpush1.msra.mxu0 0.0
        %974 = vmatprep.subr.mxu0 0.0
        %975 = vmatpush1.msra.mxu0 0.0
        %976 = vmatprep.subr.mxu0 0.0
        %977 = vmatpush1.msra.mxu0 0.0
        %978 = vmatprep.subr.mxu0 0.0
        %979 = vmatpush1.msra.mxu0 0.0
        %980 = vmatprep.subr.mxu0 0.0
        %981 = vmatpush1.msra.mxu0 0.0
        %982 = vmatprep.subr.mxu0 0.0
        %983 = vmatpush1.msra.mxu0 0.0
        %984 = vmatprep.subr.mxu0 0.0
        %985 = vmatpush1.msra.mxu0 0.0
        %986 = vmatprep.subr.mxu0 0.0
        %987 = vmatpush1.msra.mxu0 0.0
        %988 = vmatprep.subr.mxu0 0.0
        %989 = vmatpush1.msra.mxu0 0.0
        %990 = vmatprep.subr.mxu0 0.0
        %991 = vmatpush1.msra.mxu0 0.0
        %992 = vmatprep.subr.mxu0 0.0
        %993 = vmatpush1.msra.mxu0 0.0
        %994 = vmatprep.subr.mxu0 0.0
        %995 = vmatpush1.msra.mxu0 0.0
        %996 = vmatprep.subr.mxu0 0.0
        %997 = vmatpush1.msra.mxu0 0.0
        %998 = vmatprep.subr.mxu0 0.0
        %999 = vmatpush1.msra.mxu0 0.0
        %1000 = vmatprep.subr.mxu0 0.0
        %1001 = vmatpush1.msra.mxu0 0.0
        %1002 = vmatprep.subr.mxu0 0.0
        %1003 = vmatpush1.msra.mxu0 0.0
        %1004 = vmatprep.subr.mxu0 0.0
        %1005 = vmatpush1.msra.mxu0 0.0
        %1006 = vmatprep.subr.mxu0 0.0
        %1007 = vmatpush1.msra.mxu0 0.0
        %1008 = vmatprep.subr.mxu0 0.0
        %1009 = vmatpush1.msra.mxu0 0.0
        %1010 = vmatprep.mubr.f32.mxu0 0.0
        %1011 = vmatmul.mubr.f32.gmra.mrb[0].mxu0 %v944
        %v1012 = vpop.f32.mrb[0].mxu0
        %v1013 = vadd.f32 0.0, %v1012
        %v1014 = vpop.f32.mrb[0].mxu0
        %1015 = vdwg.mxu0
        %v1017 = vrot.slane %v1013, 7
        %v1019 = vadd.f32 %v734, %v1017
        %v1020 = vxor.u32 %v1019, 2147483648
        %v1021 = vmul.f32 %v1020, 1.442695
        %v1022 = vpow.pop %v1021
        %v1023 = vadd.f32 %v1022, 1.0
        %v1024 = vrcp.pop %v1023
        %v1025 = vmul.f32 1.0, %v1024
        %v1026 = vtanh.pop %v1019
        %v1028 = vrot.slane %v853, 7
        %v1030 = vmul.f32 %v1025, %v1028
        %1032 = vrot.lane.b32.xlu0 %v1026, 32
        %v1033 = vpop.permute.xlu0 %1032
        %v1035 = vmul.f32 %v1025, %v1033
        %1037 = vrot.lane.b32.xlu0 %v1035, 32
        %v1038 = vpop.permute.xlu0 %1037
        %v1040 = vadd.f32 %v1030, %v1038
        %v1041 = vtanh.pop %v1040
        %1043 = vrot.lane.b32.xlu0 %v1041, 32
        %v1044 = vpop.permute.xlu0 %1043
        %v1046 = vmul.f32 %v1025, %v1044
        %1048 = vrot.lane.b32.xlu0 %v1046, 64
        %v1049 = vpop.permute.xlu0 %1048
        %vm1051 = vcmask 254977
        %1052 = vst.msk [vmem:[%s398] sm:$0x2] %vm1051, %v1049
        %v1053 = vrot.slane %v1046, 1
        %1054 = vrot.lane.b32.xlu0 %v1053, 64
        %v1055 = vpop.permute.xlu0 %1054
        %v1056 = vsel %vm756, %v1055, 0
        %1058 = vmatprep.subr.mxu0 0.0
        %1059 = vmatpush1.msra.mxu0 %v742
        %1060 = vmatprep.subr.mxu0 0.0
        %1061 = vmatpush1.msra.mxu0 %v743
        %1062 = vmatprep.subr.mxu0 0.0
        %1063 = vmatpush1.msra.mxu0 %v744
        %1064 = vmatprep.subr.mxu0 0.0
        %1065 = vmatpush1.msra.mxu0 %v745
        %1066 = vmatprep.subr.mxu0 0.0
        %1067 = vmatpush1.msra.mxu0 0.0
        %1068 = vmatprep.subr.mxu0 0.0
        %1069 = vmatpush1.msra.mxu0 0.0
        %1070 = vmatprep.subr.mxu0 0.0
        %1071 = vmatpush1.msra.mxu0 0.0
        %1072 = vmatprep.subr.mxu0 0.0
        %1073 = vmatpush1.msra.mxu0 0.0
        %1074 = vmatprep.subr.mxu0 0.0
        %1075 = vmatpush1.msra.mxu0 0.0
        %1076 = vmatprep.subr.mxu0 0.0
        %1077 = vmatpush1.msra.mxu0 0.0
        %1078 = vmatprep.subr.mxu0 0.0
        %1079 = vmatpush1.msra.mxu0 0.0
        %1080 = vmatprep.subr.mxu0 0.0
        %1081 = vmatpush1.msra.mxu0 0.0
        %1082 = vmatprep.subr.mxu0 0.0
        %1083 = vmatpush1.msra.mxu0 0.0
        %1084 = vmatprep.subr.mxu0 0.0
        %1085 = vmatpush1.msra.mxu0 0.0
        %1086 = vmatprep.subr.mxu0 0.0
        %1087 = vmatpush1.msra.mxu0 0.0
        %1088 = vmatprep.subr.mxu0 0.0
        %1089 = vmatpush1.msra.mxu0 0.0
        %1090 = vmatprep.subr.mxu0 0.0
        %1091 = vmatpush1.msra.mxu0 0.0
        %1092 = vmatprep.subr.mxu0 0.0
        %1093 = vmatpush1.msra.mxu0 0.0
        %1094 = vmatprep.subr.mxu0 0.0
        %1095 = vmatpush1.msra.mxu0 0.0
        %1096 = vmatprep.subr.mxu0 0.0
        %1097 = vmatpush1.msra.mxu0 0.0
        %1098 = vmatprep.subr.mxu0 0.0
        %1099 = vmatpush1.msra.mxu0 0.0
        %1100 = vmatprep.subr.mxu0 0.0
        %1101 = vmatpush1.msra.mxu0 0.0
        %1102 = vmatprep.subr.mxu0 0.0
        %1103 = vmatpush1.msra.mxu0 0.0
        %1104 = vmatprep.subr.mxu0 0.0
        %1105 = vmatpush1.msra.mxu0 0.0
        %1106 = vmatprep.subr.mxu0 0.0
        %1107 = vmatpush1.msra.mxu0 0.0
        %1108 = vmatprep.subr.mxu0 0.0
        %1109 = vmatpush1.msra.mxu0 0.0
        %1110 = vmatprep.subr.mxu0 0.0
        %1111 = vmatpush1.msra.mxu0 0.0
        %1112 = vmatprep.subr.mxu0 0.0
        %1113 = vmatpush1.msra.mxu0 0.0
        %1114 = vmatprep.subr.mxu0 0.0
        %1115 = vmatpush1.msra.mxu0 0.0
        %1116 = vmatprep.subr.mxu0 0.0
        %1117 = vmatpush1.msra.mxu0 0.0
        %1118 = vmatprep.subr.mxu0 0.0
        %1119 = vmatpush1.msra.mxu0 0.0
        %1120 = vmatprep.subr.mxu0 0.0
        %1121 = vmatpush1.msra.mxu0 0.0
        %1122 = vmatprep.mubr.f32.mxu0 0.0
        %1123 = vmatmul.mubr.f32.gmra.mrb[0].mxu0 %v1056
        %v1124 = vpop.f32.mrb[0].mxu0
        %v1125 = vadd.f32 %v746, %v1124
        %v1126 = vpop.f32.mrb[0].mxu0
        %1127 = vdwg.mxu0
        %v1129 = vrot.slane %v1125, 7
        %1130 = vrot.lane.b32.xlu0 %v1129, 32
        %v1131 = vpop.permute.xlu0 %1130
        %v1133 = vsel %vm756, %v1049, %v1131
        %v1135 = vrot.slane %v1133, 1
        %v1136 = vsel %vm758, %v1135, 0
        %1138 = vmatprep.subr.mxu0 0.0
        %1139 = vmatpush1.msra.mxu0 %v737
        %1140 = vmatprep.subr.mxu0 0.0
        %1141 = vmatpush1.msra.mxu0 %v738
        %1142 = vmatprep.subr.mxu0 0.0
        %1143 = vmatpush1.msra.mxu0 %v739
        %1144 = vmatprep.subr.mxu0 0.0
        %1145 = vmatpush1.msra.mxu0 %v740
        %1146 = vmatprep.subr.mxu0 0.0
        %1147 = vmatpush1.msra.mxu0 %v763
        %1148 = vmatprep.subr.mxu0 0.0
        %1149 = vmatpush1.msra.mxu0 0.0
        %1150 = vmatprep.subr.mxu0 0.0
        %1151 = vmatpush1.msra.mxu0 0.0
        %1152 = vmatprep.subr.mxu0 0.0
        %1153 = vmatpush1.msra.mxu0 0.0
        %1154 = vmatprep.subr.mxu0 0.0
        %1155 = vmatpush1.msra.mxu0 0.0
        %1156 = vmatprep.subr.mxu0 0.0
        %1157 = vmatpush1.msra.mxu0 0.0
        %1158 = vmatprep.subr.mxu0 0.0
        %1159 = vmatpush1.msra.mxu0 0.0
        %1160 = vmatprep.subr.mxu0 0.0
        %1161 = vmatpush1.msra.mxu0 0.0
        %1162 = vmatprep.subr.mxu0 0.0
        %1163 = vmatpush1.msra.mxu0 0.0
        %1164 = vmatprep.subr.mxu0 0.0
        %1165 = vmatpush1.msra.mxu0 0.0
        %1166 = vmatprep.subr.mxu0 0.0
        %1167 = vmatpush1.msra.mxu0 0.0
        %1168 = vmatprep.subr.mxu0 0.0
        %1169 = vmatpush1.msra.mxu0 0.0
        %1170 = vmatprep.subr.mxu0 0.0
        %1171 = vmatpush1.msra.mxu0 0.0
        %1172 = vmatprep.subr.mxu0 0.0
        %1173 = vmatpush1.msra.mxu0 0.0
        %1174 = vmatprep.subr.mxu0 0.0
        %1175 = vmatpush1.msra.mxu0 0.0
        %1176 = vmatprep.subr.mxu0 0.0
        %1177 = vmatpush1.msra.mxu0 0.0
        %1178 = vmatprep.subr.mxu0 0.0
        %1179 = vmatpush1.msra.mxu0 0.0
        %1180 = vmatprep.subr.mxu0 0.0
        %1181 = vmatpush1.msra.mxu0 0.0
        %1182 = vmatprep.subr.mxu0 0.0
        %1183 = vmatpush1.msra.mxu0 0.0
        %1184 = vmatprep.subr.mxu0 0.0
        %1185 = vmatpush1.msra.mxu0 0.0
        %1186 = vmatprep.subr.mxu0 0.0
        %1187 = vmatpush1.msra.mxu0 0.0
        %1188 = vmatprep.subr.mxu0 0.0
        %1189 = vmatpush1.msra.mxu0 0.0
        %1190 = vmatprep.subr.mxu0 0.0
        %1191 = vmatpush1.msra.mxu0 0.0
        %1192 = vmatprep.subr.mxu0 0.0
        %1193 = vmatpush1.msra.mxu0 0.0
        %1194 = vmatprep.subr.mxu0 0.0
        %1195 = vmatpush1.msra.mxu0 0.0
        %1196 = vmatprep.subr.mxu0 0.0
        %1197 = vmatpush1.msra.mxu0 0.0
        %1198 = vmatprep.subr.mxu0 0.0
        %1199 = vmatpush1.msra.mxu0 0.0
        %1200 = vmatprep.subr.mxu0 0.0
        %1201 = vmatpush1.msra.mxu0 0.0
        %1202 = vmatprep.mubr.f32.mxu0 0.0
        %1203 = vmatmul.mubr.f32.gmra.mrb[0].mxu0 %v1136
        %v1204 = vpop.f32.mrb[0].mxu0
        %v1205 = vadd.f32 0.0, %v1204
        %v1206 = vpop.f32.mrb[0].mxu0
        %1207 = vdwg.mxu0
        %v1209 = vrot.slane %v1205, 6
        %v1211 = vadd.f32 %v734, %v1209
        %v1212 = vxor.u32 %v1211, 2147483648
        %v1213 = vmul.f32 %v1212, 1.442695
        %v1214 = vpow.pop %v1213
        %v1215 = vadd.f32 %v1214, 1.0
        %v1216 = vrcp.pop %v1215
        %v1217 = vmul.f32 1.0, %v1216
        %v1218 = vtanh.pop %v1211
        %v1220 = vrot.slane %v1040, 7
        %v1222 = vmul.f32 %v1217, %v1220
        %1224 = vrot.lane.b32.xlu0 %v1218, 32
        %v1225 = vpop.permute.xlu0 %1224
        %v1227 = vmul.f32 %v1217, %v1225
        %1229 = vrot.lane.b32.xlu0 %v1227, 32
        %v1230 = vpop.permute.xlu0 %1229
        %v1232 = vadd.f32 %v1222, %v1230
        %v1233 = vtanh.pop %v1232
        %1235 = vrot.lane.b32.xlu0 %v1233, 32
        %v1236 = vpop.permute.xlu0 %1235
        %v1238 = vmul.f32 %v1217, %v1236
        %1240 = vrot.lane.b32.xlu0 %v1238, 64
        %v1241 = vpop.permute.xlu0 %1240
        %vm1243 = vcmask 256002
        %1244 = vst.msk [vmem:[%s398] sm:$0x4] %vm1243, %v1241
        %v1245 = vrot.slane %v1238, 2
        %1246 = vrot.lane.b32.xlu0 %v1245, 64
        %v1247 = vpop.permute.xlu0 %1246
        %v1248 = vsel %vm756, %v1247, 0
        %1250 = vmatprep.subr.mxu0 0.0
        %1251 = vmatpush1.msra.mxu0 %v742
        %1252 = vmatprep.subr.mxu0 0.0
        %1253 = vmatpush1.msra.mxu0 %v743
        %1254 = vmatprep.subr.mxu0 0.0
        %1255 = vmatpush1.msra.mxu0 %v744
        %1256 = vmatprep.subr.mxu0 0.0
        %1257 = vmatpush1.msra.mxu0 %v745
        %1258 = vmatprep.subr.mxu0 0.0
        %1259 = vmatpush1.msra.mxu0 0.0
        %1260 = vmatprep.subr.mxu0 0.0
        %1261 = vmatpush1.msra.mxu0 0.0
        %1262 = vmatprep.subr.mxu0 0.0
        %1263 = vmatpush1.msra.mxu0 0.0
        %1264 = vmatprep.subr.mxu0 0.0
        %1265 = vmatpush1.msra.mxu0 0.0
        %1266 = vmatprep.subr.mxu0 0.0
        %1267 = vmatpush1.msra.mxu0 0.0
        %1268 = vmatprep.subr.mxu0 0.0
        %1269 = vmatpush1.msra.mxu0 0.0
        %1270 = vmatprep.subr.mxu0 0.0
        %1271 = vmatpush1.msra.mxu0 0.0
        %1272 = vmatprep.subr.mxu0 0.0
        %1273 = vmatpush1.msra.mxu0 0.0
        %1274 = vmatprep.subr.mxu0 0.0
        %1275 = vmatpush1.msra.mxu0 0.0
        %1276 = vmatprep.subr.mxu0 0.0
        %1277 = vmatpush1.msra.mxu0 0.0
        %1278 = vmatprep.subr.mxu0 0.0
        %1279 = vmatpush1.msra.mxu0 0.0
        %1280 = vmatprep.subr.mxu0 0.0
        %1281 = vmatpush1.msra.mxu0 0.0
        %1282 = vmatprep.subr.mxu0 0.0
        %1283 = vmatpush1.msra.mxu0 0.0
        %1284 = vmatprep.subr.mxu0 0.0
        %1285 = vmatpush1.msra.mxu0 0.0
        %1286 = vmatprep.subr.mxu0 0.0
        %1287 = vmatpush1.msra.mxu0 0.0
        %1288 = vmatprep.subr.mxu0 0.0
        %1289 = vmatpush1.msra.mxu0 0.0
        %1290 = vmatprep.subr.mxu0 0.0
        %1291 = vmatpush1.msra.mxu0 0.0
        %1292 = vmatprep.subr.mxu0 0.0
        %1293 = vmatpush1.msra.mxu0 0.0
        %1294 = vmatprep.subr.mxu0 0.0
        %1295 = vmatpush1.msra.mxu0 0.0
        %1296 = vmatprep.subr.mxu0 0.0
        %1297 = vmatpush1.msra.mxu0 0.0
        %1298 = vmatprep.subr.mxu0 0.0
        %1299 = vmatpush1.msra.mxu0 0.0
        %1300 = vmatprep.subr.mxu0 0.0
        %1301 = vmatpush1.msra.mxu0 0.0
        %1302 = vmatprep.subr.mxu0 0.0
        %1303 = vmatpush1.msra.mxu0 0.0
        %1304 = vmatprep.subr.mxu0 0.0
        %1305 = vmatpush1.msra.mxu0 0.0
        %1306 = vmatprep.subr.mxu0 0.0
        %1307 = vmatpush1.msra.mxu0 0.0
        %1308 = vmatprep.subr.mxu0 0.0
        %1309 = vmatpush1.msra.mxu0 0.0
        %1310 = vmatprep.subr.mxu0 0.0
        %1311 = vmatpush1.msra.mxu0 0.0
        %1312 = vmatprep.subr.mxu0 0.0
        %1313 = vmatpush1.msra.mxu0 0.0
        %1314 = vmatprep.mubr.f32.mxu0 0.0
        %1315 = vmatmul.mubr.f32.gmra.mrb[0].mxu0 %v1248
        %v1316 = vpop.f32.mrb[0].mxu0
        %v1317 = vadd.f32 %v746, %v1316
        %v1318 = vpop.f32.mrb[0].mxu0
        %1319 = vdwg.mxu0
        %v1321 = vrot.slane %v1317, 6
        %1322 = vrot.lane.b32.xlu0 %v1321, 32
        %v1323 = vpop.permute.xlu0 %1322
        %v1325 = vsel %vm756, %v1241, %v1323
        %v1327 = vrot.slane %v1325, 2
        %v1328 = vsel %vm758, %v1327, 0
        %1330 = vmatprep.subr.mxu0 0.0
        %1331 = vmatpush1.msra.mxu0 %v737
        %1332 = vmatprep.subr.mxu0 0.0
        %1333 = vmatpush1.msra.mxu0 %v738
        %1334 = vmatprep.subr.mxu0 0.0
        %1335 = vmatpush1.msra.mxu0 %v739
        %1336 = vmatprep.subr.mxu0 0.0
        %1337 = vmatpush1.msra.mxu0 %v740
        %1338 = vmatprep.subr.mxu0 0.0
        %1339 = vmatpush1.msra.mxu0 %v763
        %1340 = vmatprep.subr.mxu0 0.0
        %1341 = vmatpush1.msra.mxu0 0.0
        %1342 = vmatprep.subr.mxu0 0.0
        %1343 = vmatpush1.msra.mxu0 0.0
        %1344 = vmatprep.subr.mxu0 0.0
        %1345 = vmatpush1.msra.mxu0 0.0
        %1346 = vmatprep.subr.mxu0 0.0
        %1347 = vmatpush1.msra.mxu0 0.0
        %1348 = vmatprep.subr.mxu0 0.0
        %1349 = vmatpush1.msra.mxu0 0.0
        %1350 = vmatprep.subr.mxu0 0.0
        %1351 = vmatpush1.msra.mxu0 0.0
        %1352 = vmatprep.subr.mxu0 0.0
        %1353 = vmatpush1.msra.mxu0 0.0
        %1354 = vmatprep.subr.mxu0 0.0
        %1355 = vmatpush1.msra.mxu0 0.0
        %1356 = vmatprep.subr.mxu0 0.0
        %1357 = vmatpush1.msra.mxu0 0.0
        %1358 = vmatprep.subr.mxu0 0.0
        %1359 = vmatpush1.msra.mxu0 0.0
        %1360 = vmatprep.subr.mxu0 0.0
        %1361 = vmatpush1.msra.mxu0 0.0
        %1362 = vmatprep.subr.mxu0 0.0
        %1363 = vmatpush1.msra.mxu0 0.0
        %1364 = vmatprep.subr.mxu0 0.0
        %1365 = vmatpush1.msra.mxu0 0.0
        %1366 = vmatprep.subr.mxu0 0.0
        %1367 = vmatpush1.msra.mxu0 0.0
        %1368 = vmatprep.subr.mxu0 0.0
        %1369 = vmatpush1.msra.mxu0 0.0
        %1370 = vmatprep.subr.mxu0 0.0
        %1371 = vmatpush1.msra.mxu0 0.0
        %1372 = vmatprep.subr.mxu0 0.0
        %1373 = vmatpush1.msra.mxu0 0.0
        %1374 = vmatprep.subr.mxu0 0.0
        %1375 = vmatpush1.msra.mxu0 0.0
        %1376 = vmatprep.subr.mxu0 0.0
        %1377 = vmatpush1.msra.mxu0 0.0
        %1378 = vmatprep.subr.mxu0 0.0
        %1379 = vmatpush1.msra.mxu0 0.0
        %1380 = vmatprep.subr.mxu0 0.0
        %1381 = vmatpush1.msra.mxu0 0.0
        %1382 = vmatprep.subr.mxu0 0.0
        %1383 = vmatpush1.msra.mxu0 0.0
        %1384 = vmatprep.subr.mxu0 0.0
        %1385 = vmatpush1.msra.mxu0 0.0
        %1386 = vmatprep.subr.mxu0 0.0
        %1387 = vmatpush1.msra.mxu0 0.0
        %1388 = vmatprep.subr.mxu0 0.0
        %1389 = vmatpush1.msra.mxu0 0.0
        %1390 = vmatprep.subr.mxu0 0.0
        %1391 = vmatpush1.msra.mxu0 0.0
        %1392 = vmatprep.subr.mxu0 0.0
        %1393 = vmatpush1.msra.mxu0 0.0
        %1394 = vmatprep.mubr.f32.mxu0 0.0
        %1395 = vmatmul.mubr.f32.gmra.mrb[0].mxu0 %v1328
        %v1396 = vpop.f32.mrb[0].mxu0
        %v1397 = vadd.f32 0.0, %v1396
        %v1398 = vpop.f32.mrb[0].mxu0
        %1399 = vdwg.mxu0
        %v1401 = vrot.slane %v1397, 5
        %v1403 = vadd.f32 %v734, %v1401
        %v1404 = vxor.u32 %v1403, 2147483648
        %v1405 = vmul.f32 %v1404, 1.442695
        %v1406 = vpow.pop %v1405
        %v1407 = vadd.f32 %v1406, 1.0
        %v1408 = vrcp.pop %v1407
        %v1409 = vmul.f32 1.0, %v1408
        %v1410 = vtanh.pop %v1403
        %v1412 = vrot.slane %v1232, 7
        %v1414 = vmul.f32 %v1409, %v1412
        %1416 = vrot.lane.b32.xlu0 %v1410, 32
        %v1417 = vpop.permute.xlu0 %1416
        %v1419 = vmul.f32 %v1409, %v1417
        %1421 = vrot.lane.b32.xlu0 %v1419, 32
        %v1422 = vpop.permute.xlu0 %1421
        %v1424 = vadd.f32 %v1414, %v1422
        %v1425 = vtanh.pop %v1424
        %1427 = vrot.lane.b32.xlu0 %v1425, 32
        %v1428 = vpop.permute.xlu0 %1427
        %v1430 = vmul.f32 %v1409, %v1428
        %1432 = vrot.lane.b32.xlu0 %v1430, 64
        %v1433 = vpop.permute.xlu0 %1432
        %vm1435 = vcmask 257027
        %1436 = vst.msk [vmem:[%s398] sm:$0x8] %vm1435, %v1433
        %v1437 = vrot.slane %v1430, 3
        %1438 = vrot.lane.b32.xlu0 %v1437, 64
        %v1439 = vpop.permute.xlu0 %1438
        %v1440 = vsel %vm756, %v1439, 0
        %1442 = vmatprep.subr.mxu0 0.0
        %1443 = vmatpush1.msra.mxu0 %v742
        %1444 = vmatprep.subr.mxu0 0.0
        %1445 = vmatpush1.msra.mxu0 %v743
        %1446 = vmatprep.subr.mxu0 0.0
        %1447 = vmatpush1.msra.mxu0 %v744
        %1448 = vmatprep.subr.mxu0 0.0
        %1449 = vmatpush1.msra.mxu0 %v745
        %1450 = vmatprep.subr.mxu0 0.0
        %1451 = vmatpush1.msra.mxu0 0.0
        %1452 = vmatprep.subr.mxu0 0.0
        %1453 = vmatpush1.msra.mxu0 0.0
        %1454 = vmatprep.subr.mxu0 0.0
        %1455 = vmatpush1.msra.mxu0 0.0
        %1456 = vmatprep.subr.mxu0 0.0
        %1457 = vmatpush1.msra.mxu0 0.0
        %1458 = vmatprep.subr.mxu0 0.0
        %1459 = vmatpush1.msra.mxu0 0.0
        %1460 = vmatprep.subr.mxu0 0.0
        %1461 = vmatpush1.msra.mxu0 0.0
        %1462 = vmatprep.subr.mxu0 0.0
        %1463 = vmatpush1.msra.mxu0 0.0
        %1464 = vmatprep.subr.mxu0 0.0
        %1465 = vmatpush1.msra.mxu0 0.0
        %1466 = vmatprep.subr.mxu0 0.0
        %1467 = vmatpush1.msra.mxu0 0.0
        %1468 = vmatprep.subr.mxu0 0.0
        %1469 = vmatpush1.msra.mxu0 0.0
        %1470 = vmatprep.subr.mxu0 0.0
        %1471 = vmatpush1.msra.mxu0 0.0
        %1472 = vmatprep.subr.mxu0 0.0
        %1473 = vmatpush1.msra.mxu0 0.0
        %1474 = vmatprep.subr.mxu0 0.0
        %1475 = vmatpush1.msra.mxu0 0.0
        %1476 = vmatprep.subr.mxu0 0.0
        %1477 = vmatpush1.msra.mxu0 0.0
        %1478 = vmatprep.subr.mxu0 0.0
        %1479 = vmatpush1.msra.mxu0 0.0
        %1480 = vmatprep.subr.mxu0 0.0
        %1481 = vmatpush1.msra.mxu0 0.0
        %1482 = vmatprep.subr.mxu0 0.0
        %1483 = vmatpush1.msra.mxu0 0.0
        %1484 = vmatprep.subr.mxu0 0.0
        %1485 = vmatpush1.msra.mxu0 0.0
        %1486 = vmatprep.subr.mxu0 0.0
        %1487 = vmatpush1.msra.mxu0 0.0
        %1488 = vmatprep.subr.mxu0 0.0
        %1489 = vmatpush1.msra.mxu0 0.0
        %1490 = vmatprep.subr.mxu0 0.0
        %1491 = vmatpush1.msra.mxu0 0.0
        %1492 = vmatprep.subr.mxu0 0.0
        %1493 = vmatpush1.msra.mxu0 0.0
        %1494 = vmatprep.subr.mxu0 0.0
        %1495 = vmatpush1.msra.mxu0 0.0
        %1496 = vmatprep.subr.mxu0 0.0
        %1497 = vmatpush1.msra.mxu0 0.0
        %1498 = vmatprep.subr.mxu0 0.0
        %1499 = vmatpush1.msra.mxu0 0.0
        %1500 = vmatprep.subr.mxu0 0.0
        %1501 = vmatpush1.msra.mxu0 0.0
        %1502 = vmatprep.subr.mxu0 0.0
        %1503 = vmatpush1.msra.mxu0 0.0
        %1504 = vmatprep.subr.mxu0 0.0
        %1505 = vmatpush1.msra.mxu0 0.0
        %1506 = vmatprep.mubr.f32.mxu0 0.0
        %1507 = vmatmul.mubr.f32.gmra.mrb[0].mxu0 %v1440
        %v1508 = vpop.f32.mrb[0].mxu0
        %v1509 = vadd.f32 %v746, %v1508
        %v1510 = vpop.f32.mrb[0].mxu0
        %1511 = vdwg.mxu0
        %v1513 = vrot.slane %v1509, 5
        %1514 = vrot.lane.b32.xlu0 %v1513, 32
        %v1515 = vpop.permute.xlu0 %1514
        %v1517 = vsel %vm756, %v1433, %v1515
        %v1519 = vrot.slane %v1517, 3
        %v1520 = vsel %vm758, %v1519, 0
        %1522 = vmatprep.subr.mxu0 0.0
        %1523 = vmatpush1.msra.mxu0 %v737
        %1524 = vmatprep.subr.mxu0 0.0
        %1525 = vmatpush1.msra.mxu0 %v738
        %1526 = vmatprep.subr.mxu0 0.0
        %1527 = vmatpush1.msra.mxu0 %v739
        %1528 = vmatprep.subr.mxu0 0.0
        %1529 = vmatpush1.msra.mxu0 %v740
        %1530 = vmatprep.subr.mxu0 0.0
        %1531 = vmatpush1.msra.mxu0 %v763
        %1532 = vmatprep.subr.mxu0 0.0
        %1533 = vmatpush1.msra.mxu0 0.0
        %1534 = vmatprep.subr.mxu0 0.0
        %1535 = vmatpush1.msra.mxu0 0.0
        %1536 = vmatprep.subr.mxu0 0.0
        %1537 = vmatpush1.msra.mxu0 0.0
        %1538 = vmatprep.subr.mxu0 0.0
        %1539 = vmatpush1.msra.mxu0 0.0
        %1540 = vmatprep.subr.mxu0 0.0
        %1541 = vmatpush1.msra.mxu0 0.0
        %1542 = vmatprep.subr.mxu0 0.0
        %1543 = vmatpush1.msra.mxu0 0.0
        %1544 = vmatprep.subr.mxu0 0.0
        %1545 = vmatpush1.msra.mxu0 0.0
        %1546 = vmatprep.subr.mxu0 0.0
        %1547 = vmatpush1.msra.mxu0 0.0
        %1548 = vmatprep.subr.mxu0 0.0
        %1549 = vmatpush1.msra.mxu0 0.0
        %1550 = vmatprep.subr.mxu0 0.0
        %1551 = vmatpush1.msra.mxu0 0.0
        %1552 = vmatprep.subr.mxu0 0.0
        %1553 = vmatpush1.msra.mxu0 0.0
        %1554 = vmatprep.subr.mxu0 0.0
        %1555 = vmatpush1.msra.mxu0 0.0
        %1556 = vmatprep.subr.mxu0 0.0
        %1557 = vmatpush1.msra.mxu0 0.0
        %1558 = vmatprep.subr.mxu0 0.0
        %1559 = vmatpush1.msra.mxu0 0.0
        %1560 = vmatprep.subr.mxu0 0.0
        %1561 = vmatpush1.msra.mxu0 0.0
        %1562 = vmatprep.subr.mxu0 0.0
        %1563 = vmatpush1.msra.mxu0 0.0
        %1564 = vmatprep.subr.mxu0 0.0
        %1565 = vmatpush1.msra.mxu0 0.0
        %1566 = vmatprep.subr.mxu0 0.0
        %1567 = vmatpush1.msra.mxu0 0.0
        %1568 = vmatprep.subr.mxu0 0.0
        %1569 = vmatpush1.msra.mxu0 0.0
        %1570 = vmatprep.subr.mxu0 0.0
        %1571 = vmatpush1.msra.mxu0 0.0
        %1572 = vmatprep.subr.mxu0 0.0
        %1573 = vmatpush1.msra.mxu0 0.0
        %1574 = vmatprep.subr.mxu0 0.0
        %1575 = vmatpush1.msra.mxu0 0.0
        %1576 = vmatprep.subr.mxu0 0.0
        %1577 = vmatpush1.msra.mxu0 0.0
        %1578 = vmatprep.subr.mxu0 0.0
        %1579 = vmatpush1.msra.mxu0 0.0
        %1580 = vmatprep.subr.mxu0 0.0
        %1581 = vmatpush1.msra.mxu0 0.0
        %1582 = vmatprep.subr.mxu0 0.0
        %1583 = vmatpush1.msra.mxu0 0.0
        %1584 = vmatprep.subr.mxu0 0.0
        %1585 = vmatpush1.msra.mxu0 0.0
        %1586 = vmatprep.mubr.f32.mxu0 0.0
        %1587 = vmatmul.mubr.f32.gmra.mrb[0].mxu0 %v1520
        %v1588 = vpop.f32.mrb[0].mxu0
        %v1589 = vadd.f32 0.0, %v1588
        %v1590 = vpop.f32.mrb[0].mxu0
        %1591 = vdwg.mxu0
        %v1593 = vrot.slane %v1589, 4
        %v1595 = vadd.f32 %v734, %v1593
        %v1596 = vxor.u32 %v1595, 2147483648
        %v1597 = vmul.f32 %v1596, 1.442695
        %v1598 = vpow.pop %v1597
        %v1599 = vadd.f32 %v1598, 1.0
        %v1600 = vrcp.pop %v1599
        %v1601 = vmul.f32 1.0, %v1600
        %v1602 = vtanh.pop %v1595
        %v1604 = vrot.slane %v1424, 7
        %v1606 = vmul.f32 %v1601, %v1604
        %1608 = vrot.lane.b32.xlu0 %v1602, 32
        %v1609 = vpop.permute.xlu0 %1608
        %v1611 = vmul.f32 %v1601, %v1609
        %1613 = vrot.lane.b32.xlu0 %v1611, 32
        %v1614 = vpop.permute.xlu0 %1613
        %v1616 = vadd.f32 %v1606, %v1614
        %v1617 = vtanh.pop %v1616
        %1619 = vrot.lane.b32.xlu0 %v1617, 32
        %v1620 = vpop.permute.xlu0 %1619
        %v1622 = vmul.f32 %v1601, %v1620
        %1624 = vrot.lane.b32.xlu0 %v1622, 64
        %v1625 = vpop.permute.xlu0 %1624
        %vm1627 = vcmask 258052
        %1628 = vst.msk [vmem:[%s398] sm:$0x10] %vm1627, %v1625
        %v1629 = vrot.slane %v1622, 4
        %1630 = vrot.lane.b32.xlu0 %v1629, 64
        %v1631 = vpop.permute.xlu0 %1630
        %v1632 = vsel %vm756, %v1631, 0
        %1634 = vmatprep.subr.mxu0 0.0
        %1635 = vmatpush1.msra.mxu0 %v742
        %1636 = vmatprep.subr.mxu0 0.0
        %1637 = vmatpush1.msra.mxu0 %v743
        %1638 = vmatprep.subr.mxu0 0.0
        %1639 = vmatpush1.msra.mxu0 %v744
        %1640 = vmatprep.subr.mxu0 0.0
        %1641 = vmatpush1.msra.mxu0 %v745
        %1642 = vmatprep.subr.mxu0 0.0
        %1643 = vmatpush1.msra.mxu0 0.0
        %1644 = vmatprep.subr.mxu0 0.0
        %1645 = vmatpush1.msra.mxu0 0.0
        %1646 = vmatprep.subr.mxu0 0.0
        %1647 = vmatpush1.msra.mxu0 0.0
        %1648 = vmatprep.subr.mxu0 0.0
        %1649 = vmatpush1.msra.mxu0 0.0
        %1650 = vmatprep.subr.mxu0 0.0
        %1651 = vmatpush1.msra.mxu0 0.0
        %1652 = vmatprep.subr.mxu0 0.0
        %1653 = vmatpush1.msra.mxu0 0.0
        %1654 = vmatprep.subr.mxu0 0.0
        %1655 = vmatpush1.msra.mxu0 0.0
        %1656 = vmatprep.subr.mxu0 0.0
        %1657 = vmatpush1.msra.mxu0 0.0
        %1658 = vmatprep.subr.mxu0 0.0
        %1659 = vmatpush1.msra.mxu0 0.0
        %1660 = vmatprep.subr.mxu0 0.0
        %1661 = vmatpush1.msra.mxu0 0.0
        %1662 = vmatprep.subr.mxu0 0.0
        %1663 = vmatpush1.msra.mxu0 0.0
        %1664 = vmatprep.subr.mxu0 0.0
        %1665 = vmatpush1.msra.mxu0 0.0
        %1666 = vmatprep.subr.mxu0 0.0
        %1667 = vmatpush1.msra.mxu0 0.0
        %1668 = vmatprep.subr.mxu0 0.0
        %1669 = vmatpush1.msra.mxu0 0.0
        %1670 = vmatprep.subr.mxu0 0.0
        %1671 = vmatpush1.msra.mxu0 0.0
        %1672 = vmatprep.subr.mxu0 0.0
        %1673 = vmatpush1.msra.mxu0 0.0
        %1674 = vmatprep.subr.mxu0 0.0
        %1675 = vmatpush1.msra.mxu0 0.0
        %1676 = vmatprep.subr.mxu0 0.0
        %1677 = vmatpush1.msra.mxu0 0.0
        %1678 = vmatprep.subr.mxu0 0.0
        %1679 = vmatpush1.msra.mxu0 0.0
        %1680 = vmatprep.subr.mxu0 0.0
        %1681 = vmatpush1.msra.mxu0 0.0
        %1682 = vmatprep.subr.mxu0 0.0
        %1683 = vmatpush1.msra.mxu0 0.0
        %1684 = vmatprep.subr.mxu0 0.0
        %1685 = vmatpush1.msra.mxu0 0.0
        %1686 = vmatprep.subr.mxu0 0.0
        %1687 = vmatpush1.msra.mxu0 0.0
        %1688 = vmatprep.subr.mxu0 0.0
        %1689 = vmatpush1.msra.mxu0 0.0
        %1690 = vmatprep.subr.mxu0 0.0
        %1691 = vmatpush1.msra.mxu0 0.0
        %1692 = vmatprep.subr.mxu0 0.0
        %1693 = vmatpush1.msra.mxu0 0.0
        %1694 = vmatprep.subr.mxu0 0.0
        %1695 = vmatpush1.msra.mxu0 0.0
        %1696 = vmatprep.subr.mxu0 0.0
        %1697 = vmatpush1.msra.mxu0 0.0
        %1698 = vmatprep.mubr.f32.mxu0 0.0
        %1699 = vmatmul.mubr.f32.gmra.mrb[0].mxu0 %v1632
        %v1700 = vpop.f32.mrb[0].mxu0
        %v1701 = vadd.f32 %v746, %v1700
        %v1702 = vpop.f32.mrb[0].mxu0
        %1703 = vdwg.mxu0
        %v1705 = vrot.slane %v1701, 4
        %1706 = vrot.lane.b32.xlu0 %v1705, 32
        %v1707 = vpop.permute.xlu0 %1706
        %v1709 = vsel %vm756, %v1625, %v1707
        %v1711 = vrot.slane %v1709, 4
        %v1712 = vsel %vm758, %v1711, 0
        %1714 = vmatprep.subr.mxu0 0.0
        %1715 = vmatpush1.msra.mxu0 %v737
        %1716 = vmatprep.subr.mxu0 0.0
        %1717 = vmatpush1.msra.mxu0 %v738
        %1718 = vmatprep.subr.mxu0 0.0
        %1719 = vmatpush1.msra.mxu0 %v739
        %1720 = vmatprep.subr.mxu0 0.0
        %1721 = vmatpush1.msra.mxu0 %v740
        %1722 = vmatprep.subr.mxu0 0.0
        %1723 = vmatpush1.msra.mxu0 %v763
        %1724 = vmatprep.subr.mxu0 0.0
        %1725 = vmatpush1.msra.mxu0 0.0
        %1726 = vmatprep.subr.mxu0 0.0
        %1727 = vmatpush1.msra.mxu0 0.0
        %1728 = vmatprep.subr.mxu0 0.0
        %1729 = vmatpush1.msra.mxu0 0.0
        %1730 = vmatprep.subr.mxu0 0.0
        %1731 = vmatpush1.msra.mxu0 0.0
        %1732 = vmatprep.subr.mxu0 0.0
        %1733 = vmatpush1.msra.mxu0 0.0
        %1734 = vmatprep.subr.mxu0 0.0
        %1735 = vmatpush1.msra.mxu0 0.0
        %1736 = vmatprep.subr.mxu0 0.0
        %1737 = vmatpush1.msra.mxu0 0.0
        %1738 = vmatprep.subr.mxu0 0.0
        %1739 = vmatpush1.msra.mxu0 0.0
        %1740 = vmatprep.subr.mxu0 0.0
        %1741 = vmatpush1.msra.mxu0 0.0
        %1742 = vmatprep.subr.mxu0 0.0
        %1743 = vmatpush1.msra.mxu0 0.0
        %1744 = vmatprep.subr.mxu0 0.0
        %1745 = vmatpush1.msra.mxu0 0.0
        %1746 = vmatprep.subr.mxu0 0.0
        %1747 = vmatpush1.msra.mxu0 0.0
        %1748 = vmatprep.subr.mxu0 0.0
        %1749 = vmatpush1.msra.mxu0 0.0
        %1750 = vmatprep.subr.mxu0 0.0
        %1751 = vmatpush1.msra.mxu0 0.0
        %1752 = vmatprep.subr.mxu0 0.0
        %1753 = vmatpush1.msra.mxu0 0.0
        %1754 = vmatprep.subr.mxu0 0.0
        %1755 = vmatpush1.msra.mxu0 0.0
        %1756 = vmatprep.subr.mxu0 0.0
        %1757 = vmatpush1.msra.mxu0 0.0
        %1758 = vmatprep.subr.mxu0 0.0
        %1759 = vmatpush1.msra.mxu0 0.0
        %1760 = vmatprep.subr.mxu0 0.0
        %1761 = vmatpush1.msra.mxu0 0.0
        %1762 = vmatprep.subr.mxu0 0.0
        %1763 = vmatpush1.msra.mxu0 0.0
        %1764 = vmatprep.subr.mxu0 0.0
        %1765 = vmatpush1.msra.mxu0 0.0
        %1766 = vmatprep.subr.mxu0 0.0
        %1767 = vmatpush1.msra.mxu0 0.0
        %1768 = vmatprep.subr.mxu0 0.0
        %1769 = vmatpush1.msra.mxu0 0.0
        %1770 = vmatprep.subr.mxu0 0.0
        %1771 = vmatpush1.msra.mxu0 0.0
        %1772 = vmatprep.subr.mxu0 0.0
        %1773 = vmatpush1.msra.mxu0 0.0
        %1774 = vmatprep.subr.mxu0 0.0
        %1775 = vmatpush1.msra.mxu0 0.0
        %1776 = vmatprep.subr.mxu0 0.0
        %1777 = vmatpush1.msra.mxu0 0.0
        %1778 = vmatprep.mubr.f32.mxu0 0.0
        %1779 = vmatmul.mubr.f32.gmra.mrb[0].mxu0 %v1712
        %v1780 = vpop.f32.mrb[0].mxu0
        %v1781 = vadd.f32 0.0, %v1780
        %v1782 = vpop.f32.mrb[0].mxu0
        %1783 = vdwg.mxu0
        %v1785 = vrot.slane %v1781, 3
        %v1787 = vadd.f32 %v734, %v1785
        %v1788 = vxor.u32 %v1787, 2147483648
        %v1789 = vmul.f32 %v1788, 1.442695
        %v1790 = vpow.pop %v1789
        %v1791 = vadd.f32 %v1790, 1.0
        %v1792 = vrcp.pop %v1791
        %v1793 = vmul.f32 1.0, %v1792
        %v1794 = vtanh.pop %v1787
        %v1796 = vrot.slane %v1616, 7
        %v1798 = vmul.f32 %v1793, %v1796
        %1800 = vrot.lane.b32.xlu0 %v1794, 32
        %v1801 = vpop.permute.xlu0 %1800
        %v1803 = vmul.f32 %v1793, %v1801
        %1805 = vrot.lane.b32.xlu0 %v1803, 32
        %v1806 = vpop.permute.xlu0 %1805
        %v1808 = vadd.f32 %v1798, %v1806
        %v1809 = vtanh.pop %v1808
        %1811 = vrot.lane.b32.xlu0 %v1809, 32
        %v1812 = vpop.permute.xlu0 %1811
        %v1814 = vmul.f32 %v1793, %v1812
        %1816 = vrot.lane.b32.xlu0 %v1814, 64
        %v1817 = vpop.permute.xlu0 %1816
        %vm1819 = vcmask 259077
        %1820 = vst.msk [vmem:[%s398] sm:$0x20] %vm1819, %v1817
        %v1821 = vrot.slane %v1814, 5
        %1822 = vrot.lane.b32.xlu0 %v1821, 64
        %v1823 = vpop.permute.xlu0 %1822
        %v1824 = vsel %vm756, %v1823, 0
        %1826 = vmatprep.subr.mxu0 0.0
        %1827 = vmatpush1.msra.mxu0 %v742
        %1828 = vmatprep.subr.mxu0 0.0
        %1829 = vmatpush1.msra.mxu0 %v743
        %1830 = vmatprep.subr.mxu0 0.0
        %1831 = vmatpush1.msra.mxu0 %v744
        %1832 = vmatprep.subr.mxu0 0.0
        %1833 = vmatpush1.msra.mxu0 %v745
        %1834 = vmatprep.subr.mxu0 0.0
        %1835 = vmatpush1.msra.mxu0 0.0
        %1836 = vmatprep.subr.mxu0 0.0
        %1837 = vmatpush1.msra.mxu0 0.0
        %1838 = vmatprep.subr.mxu0 0.0
        %1839 = vmatpush1.msra.mxu0 0.0
        %1840 = vmatprep.subr.mxu0 0.0
        %1841 = vmatpush1.msra.mxu0 0.0
        %1842 = vmatprep.subr.mxu0 0.0
        %1843 = vmatpush1.msra.mxu0 0.0
        %1844 = vmatprep.subr.mxu0 0.0
        %1845 = vmatpush1.msra.mxu0 0.0
        %1846 = vmatprep.subr.mxu0 0.0
        %1847 = vmatpush1.msra.mxu0 0.0
        %1848 = vmatprep.subr.mxu0 0.0
        %1849 = vmatpush1.msra.mxu0 0.0
        %1850 = vmatprep.subr.mxu0 0.0
        %1851 = vmatpush1.msra.mxu0 0.0
        %1852 = vmatprep.subr.mxu0 0.0
        %1853 = vmatpush1.msra.mxu0 0.0
        %1854 = vmatprep.subr.mxu0 0.0
        %1855 = vmatpush1.msra.mxu0 0.0
        %1856 = vmatprep.subr.mxu0 0.0
        %1857 = vmatpush1.msra.mxu0 0.0
        %1858 = vmatprep.subr.mxu0 0.0
        %1859 = vmatpush1.msra.mxu0 0.0
        %1860 = vmatprep.subr.mxu0 0.0
        %1861 = vmatpush1.msra.mxu0 0.0
        %1862 = vmatprep.subr.mxu0 0.0
        %1863 = vmatpush1.msra.mxu0 0.0
        %1864 = vmatprep.subr.mxu0 0.0
        %1865 = vmatpush1.msra.mxu0 0.0
        %1866 = vmatprep.subr.mxu0 0.0
        %1867 = vmatpush1.msra.mxu0 0.0
        %1868 = vmatprep.subr.mxu0 0.0
        %1869 = vmatpush1.msra.mxu0 0.0
        %1870 = vmatprep.subr.mxu0 0.0
        %1871 = vmatpush1.msra.mxu0 0.0
        %1872 = vmatprep.subr.mxu0 0.0
        %1873 = vmatpush1.msra.mxu0 0.0
        %1874 = vmatprep.subr.mxu0 0.0
        %1875 = vmatpush1.msra.mxu0 0.0
        %1876 = vmatprep.subr.mxu0 0.0
        %1877 = vmatpush1.msra.mxu0 0.0
        %1878 = vmatprep.subr.mxu0 0.0
        %1879 = vmatpush1.msra.mxu0 0.0
        %1880 = vmatprep.subr.mxu0 0.0
        %1881 = vmatpush1.msra.mxu0 0.0
        %1882 = vmatprep.subr.mxu0 0.0
        %1883 = vmatpush1.msra.mxu0 0.0
        %1884 = vmatprep.subr.mxu0 0.0
        %1885 = vmatpush1.msra.mxu0 0.0
        %1886 = vmatprep.subr.mxu0 0.0
        %1887 = vmatpush1.msra.mxu0 0.0
        %1888 = vmatprep.subr.mxu0 0.0
        %1889 = vmatpush1.msra.mxu0 0.0
        %1890 = vmatprep.mubr.f32.mxu0 0.0
        %1891 = vmatmul.mubr.f32.gmra.mrb[0].mxu0 %v1824
        %v1892 = vpop.f32.mrb[0].mxu0
        %v1893 = vadd.f32 %v746, %v1892
        %v1894 = vpop.f32.mrb[0].mxu0
        %1895 = vdwg.mxu0
        %v1897 = vrot.slane %v1893, 3
        %1898 = vrot.lane.b32.xlu0 %v1897, 32
        %v1899 = vpop.permute.xlu0 %1898
        %v1901 = vsel %vm756, %v1817, %v1899
        %v1903 = vrot.slane %v1901, 5
        %v1904 = vsel %vm758, %v1903, 0
        %1906 = vmatprep.subr.mxu0 0.0
        %1907 = vmatpush1.msra.mxu0 %v737
        %1908 = vmatprep.subr.mxu0 0.0
        %1909 = vmatpush1.msra.mxu0 %v738
        %1910 = vmatprep.subr.mxu0 0.0
        %1911 = vmatpush1.msra.mxu0 %v739
        %1912 = vmatprep.subr.mxu0 0.0
        %1913 = vmatpush1.msra.mxu0 %v740
        %1914 = vmatprep.subr.mxu0 0.0
        %1915 = vmatpush1.msra.mxu0 %v763
        %1916 = vmatprep.subr.mxu0 0.0
        %1917 = vmatpush1.msra.mxu0 0.0
        %1918 = vmatprep.subr.mxu0 0.0
        %1919 = vmatpush1.msra.mxu0 0.0
        %1920 = vmatprep.subr.mxu0 0.0
        %1921 = vmatpush1.msra.mxu0 0.0
        %1922 = vmatprep.subr.mxu0 0.0
        %1923 = vmatpush1.msra.mxu0 0.0
        %1924 = vmatprep.subr.mxu0 0.0
        %1925 = vmatpush1.msra.mxu0 0.0
        %1926 = vmatprep.subr.mxu0 0.0
        %1927 = vmatpush1.msra.mxu0 0.0
        %1928 = vmatprep.subr.mxu0 0.0
        %1929 = vmatpush1.msra.mxu0 0.0
        %1930 = vmatprep.subr.mxu0 0.0
        %1931 = vmatpush1.msra.mxu0 0.0
        %1932 = vmatprep.subr.mxu0 0.0
        %1933 = vmatpush1.msra.mxu0 0.0
        %1934 = vmatprep.subr.mxu0 0.0
        %1935 = vmatpush1.msra.mxu0 0.0
        %1936 = vmatprep.subr.mxu0 0.0
        %1937 = vmatpush1.msra.mxu0 0.0
        %1938 = vmatprep.subr.mxu0 0.0
        %1939 = vmatpush1.msra.mxu0 0.0
        %1940 = vmatprep.subr.mxu0 0.0
        %1941 = vmatpush1.msra.mxu0 0.0
        %1942 = vmatprep.subr.mxu0 0.0
        %1943 = vmatpush1.msra.mxu0 0.0
        %1944 = vmatprep.subr.mxu0 0.0
        %1945 = vmatpush1.msra.mxu0 0.0
        %1946 = vmatprep.subr.mxu0 0.0
        %1947 = vmatpush1.msra.mxu0 0.0
        %1948 = vmatprep.subr.mxu0 0.0
        %1949 = vmatpush1.msra.mxu0 0.0
        %1950 = vmatprep.subr.mxu0 0.0
        %1951 = vmatpush1.msra.mxu0 0.0
        %1952 = vmatprep.subr.mxu0 0.0
        %1953 = vmatpush1.msra.mxu0 0.0
        %1954 = vmatprep.subr.mxu0 0.0
        %1955 = vmatpush1.msra.mxu0 0.0
        %1956 = vmatprep.subr.mxu0 0.0
        %1957 = vmatpush1.msra.mxu0 0.0
        %1958 = vmatprep.subr.mxu0 0.0
        %1959 = vmatpush1.msra.mxu0 0.0
        %1960 = vmatprep.subr.mxu0 0.0
        %1961 = vmatpush1.msra.mxu0 0.0
        %1962 = vmatprep.subr.mxu0 0.0
        %1963 = vmatpush1.msra.mxu0 0.0
        %1964 = vmatprep.subr.mxu0 0.0
        %1965 = vmatpush1.msra.mxu0 0.0
        %1966 = vmatprep.subr.mxu0 0.0
        %1967 = vmatpush1.msra.mxu0 0.0
        %1968 = vmatprep.subr.mxu0 0.0
        %1969 = vmatpush1.msra.mxu0 0.0
        %1970 = vmatprep.mubr.f32.mxu0 0.0
        %1971 = vmatmul.mubr.f32.gmra.mrb[0].mxu0 %v1904
        %v1972 = vpop.f32.mrb[0].mxu0
        %v1973 = vadd.f32 0.0, %v1972
        %v1974 = vpop.f32.mrb[0].mxu0
        %1975 = vdwg.mxu0
        %v1977 = vrot.slane %v1973, 2
        %v1979 = vadd.f32 %v734, %v1977
        %v1980 = vxor.u32 %v1979, 2147483648
        %v1981 = vmul.f32 %v1980, 1.442695
        %v1982 = vpow.pop %v1981
        %v1983 = vadd.f32 %v1982, 1.0
        %v1984 = vrcp.pop %v1983
        %v1985 = vmul.f32 1.0, %v1984
        %v1986 = vtanh.pop %v1979
        %v1988 = vrot.slane %v1808, 7
        %v1990 = vmul.f32 %v1985, %v1988
        %1992 = vrot.lane.b32.xlu0 %v1986, 32
        %v1993 = vpop.permute.xlu0 %1992
        %v1995 = vmul.f32 %v1985, %v1993
        %1997 = vrot.lane.b32.xlu0 %v1995, 32
        %v1998 = vpop.permute.xlu0 %1997
        %v2000 = vadd.f32 %v1990, %v1998
        %v2001 = vtanh.pop %v2000
        %2003 = vrot.lane.b32.xlu0 %v2001, 32
        %v2004 = vpop.permute.xlu0 %2003
        %v2006 = vmul.f32 %v1985, %v2004
        %2008 = vrot.lane.b32.xlu0 %v2006, 64
        %v2009 = vpop.permute.xlu0 %2008
        %vm2011 = vcmask 260102
        %2012 = vst.msk [vmem:[%s398] sm:$0x40] %vm2011, %v2009
        %v2013 = vrot.slane %v2006, 6
        %2014 = vrot.lane.b32.xlu0 %v2013, 64
        %v2015 = vpop.permute.xlu0 %2014
        %v2016 = vsel %vm756, %v2015, 0
        %2018 = vmatprep.subr.mxu0 0.0
        %2019 = vmatpush1.msra.mxu0 %v742
        %2020 = vmatprep.subr.mxu0 0.0
        %2021 = vmatpush1.msra.mxu0 %v743
        %2022 = vmatprep.subr.mxu0 0.0
        %2023 = vmatpush1.msra.mxu0 %v744
        %2024 = vmatprep.subr.mxu0 0.0
        %2025 = vmatpush1.msra.mxu0 %v745
        %2026 = vmatprep.subr.mxu0 0.0
        %2027 = vmatpush1.msra.mxu0 0.0
        %2028 = vmatprep.subr.mxu0 0.0
        %2029 = vmatpush1.msra.mxu0 0.0
        %2030 = vmatprep.subr.mxu0 0.0
        %2031 = vmatpush1.msra.mxu0 0.0
        %2032 = vmatprep.subr.mxu0 0.0
        %2033 = vmatpush1.msra.mxu0 0.0
        %2034 = vmatprep.subr.mxu0 0.0
        %2035 = vmatpush1.msra.mxu0 0.0
        %2036 = vmatprep.subr.mxu0 0.0
        %2037 = vmatpush1.msra.mxu0 0.0
        %2038 = vmatprep.subr.mxu0 0.0
        %2039 = vmatpush1.msra.mxu0 0.0
        %2040 = vmatprep.subr.mxu0 0.0
        %2041 = vmatpush1.msra.mxu0 0.0
        %2042 = vmatprep.subr.mxu0 0.0
        %2043 = vmatpush1.msra.mxu0 0.0
        %2044 = vmatprep.subr.mxu0 0.0
        %2045 = vmatpush1.msra.mxu0 0.0
        %2046 = vmatprep.subr.mxu0 0.0
        %2047 = vmatpush1.msra.mxu0 0.0
        %2048 = vmatprep.subr.mxu0 0.0
        %2049 = vmatpush1.msra.mxu0 0.0
        %2050 = vmatprep.subr.mxu0 0.0
        %2051 = vmatpush1.msra.mxu0 0.0
        %2052 = vmatprep.subr.mxu0 0.0
        %2053 = vmatpush1.msra.mxu0 0.0
        %2054 = vmatprep.subr.mxu0 0.0
        %2055 = vmatpush1.msra.mxu0 0.0
        %2056 = vmatprep.subr.mxu0 0.0
        %2057 = vmatpush1.msra.mxu0 0.0
        %2058 = vmatprep.subr.mxu0 0.0
        %2059 = vmatpush1.msra.mxu0 0.0
        %2060 = vmatprep.subr.mxu0 0.0
        %2061 = vmatpush1.msra.mxu0 0.0
        %2062 = vmatprep.subr.mxu0 0.0
        %2063 = vmatpush1.msra.mxu0 0.0
        %2064 = vmatprep.subr.mxu0 0.0
        %2065 = vmatpush1.msra.mxu0 0.0
        %2066 = vmatprep.subr.mxu0 0.0
        %2067 = vmatpush1.msra.mxu0 0.0
        %2068 = vmatprep.subr.mxu0 0.0
        %2069 = vmatpush1.msra.mxu0 0.0
        %2070 = vmatprep.subr.mxu0 0.0
        %2071 = vmatpush1.msra.mxu0 0.0
        %2072 = vmatprep.subr.mxu0 0.0
        %2073 = vmatpush1.msra.mxu0 0.0
        %2074 = vmatprep.subr.mxu0 0.0
        %2075 = vmatpush1.msra.mxu0 0.0
        %2076 = vmatprep.subr.mxu0 0.0
        %2077 = vmatpush1.msra.mxu0 0.0
        %2078 = vmatprep.subr.mxu0 0.0
        %2079 = vmatpush1.msra.mxu0 0.0
        %2080 = vmatprep.subr.mxu0 0.0
        %2081 = vmatpush1.msra.mxu0 0.0
        %2082 = vmatprep.mubr.f32.mxu0 0.0
        %2083 = vmatmul.mubr.f32.gmra.mrb[0].mxu0 %v2016
        %v2084 = vpop.f32.mrb[0].mxu0
        %v2085 = vadd.f32 %v746, %v2084
        %v2086 = vpop.f32.mrb[0].mxu0
        %2087 = vdwg.mxu0
        %v2089 = vrot.slane %v2085, 2
        %2090 = vrot.lane.b32.xlu0 %v2089, 32
        %v2091 = vpop.permute.xlu0 %2090
        %v2093 = vsel %vm756, %v2009, %v2091
        %v2095 = vrot.slane %v2093, 6
        %v2096 = vsel %vm758, %v2095, 0
        %2098 = vmatprep.subr.mxu0 0.0
        %2099 = vmatpush1.msra.mxu0 %v737
        %2100 = vmatprep.subr.mxu0 0.0
        %2101 = vmatpush1.msra.mxu0 %v738
        %2102 = vmatprep.subr.mxu0 0.0
        %2103 = vmatpush1.msra.mxu0 %v739
        %2104 = vmatprep.subr.mxu0 0.0
        %2105 = vmatpush1.msra.mxu0 %v740
        %2106 = vmatprep.subr.mxu0 0.0
        %2107 = vmatpush1.msra.mxu0 %v763
        %2108 = vmatprep.subr.mxu0 0.0
        %2109 = vmatpush1.msra.mxu0 0.0
        %2110 = vmatprep.subr.mxu0 0.0
        %2111 = vmatpush1.msra.mxu0 0.0
        %2112 = vmatprep.subr.mxu0 0.0
        %2113 = vmatpush1.msra.mxu0 0.0
        %2114 = vmatprep.subr.mxu0 0.0
        %2115 = vmatpush1.msra.mxu0 0.0
        %2116 = vmatprep.subr.mxu0 0.0
        %2117 = vmatpush1.msra.mxu0 0.0
        %2118 = vmatprep.subr.mxu0 0.0
        %2119 = vmatpush1.msra.mxu0 0.0
        %2120 = vmatprep.subr.mxu0 0.0
        %2121 = vmatpush1.msra.mxu0 0.0
        %2122 = vmatprep.subr.mxu0 0.0
        %2123 = vmatpush1.msra.mxu0 0.0
        %2124 = vmatprep.subr.mxu0 0.0
        %2125 = vmatpush1.msra.mxu0 0.0
        %2126 = vmatprep.subr.mxu0 0.0
        %2127 = vmatpush1.msra.mxu0 0.0
        %2128 = vmatprep.subr.mxu0 0.0
        %2129 = vmatpush1.msra.mxu0 0.0
        %2130 = vmatprep.subr.mxu0 0.0
        %2131 = vmatpush1.msra.mxu0 0.0
        %2132 = vmatprep.subr.mxu0 0.0
        %2133 = vmatpush1.msra.mxu0 0.0
        %2134 = vmatprep.subr.mxu0 0.0
        %2135 = vmatpush1.msra.mxu0 0.0
        %2136 = vmatprep.subr.mxu0 0.0
        %2137 = vmatpush1.msra.mxu0 0.0
        %2138 = vmatprep.subr.mxu0 0.0
        %2139 = vmatpush1.msra.mxu0 0.0
        %2140 = vmatprep.subr.mxu0 0.0
        %2141 = vmatpush1.msra.mxu0 0.0
        %2142 = vmatprep.subr.mxu0 0.0
        %2143 = vmatpush1.msra.mxu0 0.0
        %2144 = vmatprep.subr.mxu0 0.0
        %2145 = vmatpush1.msra.mxu0 0.0
        %2146 = vmatprep.subr.mxu0 0.0
        %2147 = vmatpush1.msra.mxu0 0.0
        %2148 = vmatprep.subr.mxu0 0.0
        %2149 = vmatpush1.msra.mxu0 0.0
        %2150 = vmatprep.subr.mxu0 0.0
        %2151 = vmatpush1.msra.mxu0 0.0
        %2152 = vmatprep.subr.mxu0 0.0
        %2153 = vmatpush1.msra.mxu0 0.0
        %2154 = vmatprep.subr.mxu0 0.0
        %2155 = vmatpush1.msra.mxu0 0.0
        %2156 = vmatprep.subr.mxu0 0.0
        %2157 = vmatpush1.msra.mxu0 0.0
        %2158 = vmatprep.subr.mxu0 0.0
        %2159 = vmatpush1.msra.mxu0 0.0
        %2160 = vmatprep.subr.mxu0 0.0
        %2161 = vmatpush1.msra.mxu0 0.0
        %2162 = vmatprep.mubr.f32.mxu0 0.0
        %2163 = vmatmul.mubr.f32.gmra.mrb[0].mxu0 %v2096
        %v2164 = vpop.f32.mrb[0].mxu0
        %v2165 = vadd.f32 0.0, %v2164
        %v2166 = vpop.f32.mrb[0].mxu0
        %2167 = vdwg.mxu0
        %v2169 = vrot.slane %v2165, 1
        %v2171 = vadd.f32 %v734, %v2169
        %v2172 = vxor.u32 %v2171, 2147483648
        %v2173 = vmul.f32 %v2172, 1.442695
        %v2174 = vpow.pop %v2173
        %v2175 = vadd.f32 %v2174, 1.0
        %v2176 = vrcp.pop %v2175
        %v2177 = vmul.f32 1.0, %v2176
        %v2178 = vtanh.pop %v2171
        %v2180 = vrot.slane %v2000, 7
        %v2182 = vmul.f32 %v2177, %v2180
        %2184 = vrot.lane.b32.xlu0 %v2178, 32
        %v2185 = vpop.permute.xlu0 %2184
        %v2187 = vmul.f32 %v2177, %v2185
        %2189 = vrot.lane.b32.xlu0 %v2187, 32
        %v2190 = vpop.permute.xlu0 %2189
        %v2192 = vadd.f32 %v2182, %v2190
        %v2193 = vtanh.pop %v2192
        %2195 = vrot.lane.b32.xlu0 %v2193, 32
        %v2196 = vpop.permute.xlu0 %2195
        %v2198 = vmul.f32 %v2177, %v2196
        %2200 = vrot.lane.b32.xlu0 %v2198, 64
        %v2201 = vpop.permute.xlu0 %2200
        %vm2203 = vcmask 261127
        %2204 = vst.msk [vmem:[%s398] sm:$0x80] %vm2203, %v2201
        %v2205 = vrot.slane %v2198, 7
        %2206 = vrot.lane.b32.xlu0 %v2205, 64
        %v2207 = vpop.permute.xlu0 %2206
        %v2208 = vsel %vm756, %v2207, 0
        %2210 = vmatprep.subr.mxu0 0.0
        %2211 = vmatpush1.msra.mxu0 %v742
        %2212 = vmatprep.subr.mxu0 0.0
        %2213 = vmatpush1.msra.mxu0 %v743
        %2214 = vmatprep.subr.mxu0 0.0
        %2215 = vmatpush1.msra.mxu0 %v744
        %2216 = vmatprep.subr.mxu0 0.0
        %2217 = vmatpush1.msra.mxu0 %v745
        %2218 = vmatprep.subr.mxu0 0.0
        %2219 = vmatpush1.msra.mxu0 0.0
        %2220 = vmatprep.subr.mxu0 0.0
        %2221 = vmatpush1.msra.mxu0 0.0
        %2222 = vmatprep.subr.mxu0 0.0
        %2223 = vmatpush1.msra.mxu0 0.0
        %2224 = vmatprep.subr.mxu0 0.0
        %2225 = vmatpush1.msra.mxu0 0.0
        %2226 = vmatprep.subr.mxu0 0.0
        %2227 = vmatpush1.msra.mxu0 0.0
        %2228 = vmatprep.subr.mxu0 0.0
        %2229 = vmatpush1.msra.mxu0 0.0
        %2230 = vmatprep.subr.mxu0 0.0
        %2231 = vmatpush1.msra.mxu0 0.0
        %2232 = vmatprep.subr.mxu0 0.0
        %2233 = vmatpush1.msra.mxu0 0.0
        %2234 = vmatprep.subr.mxu0 0.0
        %2235 = vmatpush1.msra.mxu0 0.0
        %2236 = vmatprep.subr.mxu0 0.0
        %2237 = vmatpush1.msra.mxu0 0.0
        %2238 = vmatprep.subr.mxu0 0.0
        %2239 = vmatpush1.msra.mxu0 0.0
        %2240 = vmatprep.subr.mxu0 0.0
        %2241 = vmatpush1.msra.mxu0 0.0
        %2242 = vmatprep.subr.mxu0 0.0
        %2243 = vmatpush1.msra.mxu0 0.0
        %2244 = vmatprep.subr.mxu0 0.0
        %2245 = vmatpush1.msra.mxu0 0.0
        %2246 = vmatprep.subr.mxu0 0.0
        %2247 = vmatpush1.msra.mxu0 0.0
        %2248 = vmatprep.subr.mxu0 0.0
        %2249 = vmatpush1.msra.mxu0 0.0
        %2250 = vmatprep.subr.mxu0 0.0
        %2251 = vmatpush1.msra.mxu0 0.0
        %2252 = vmatprep.subr.mxu0 0.0
        %2253 = vmatpush1.msra.mxu0 0.0
        %2254 = vmatprep.subr.mxu0 0.0
        %2255 = vmatpush1.msra.mxu0 0.0
        %2256 = vmatprep.subr.mxu0 0.0
        %2257 = vmatpush1.msra.mxu0 0.0
        %2258 = vmatprep.subr.mxu0 0.0
        %2259 = vmatpush1.msra.mxu0 0.0
        %2260 = vmatprep.subr.mxu0 0.0
        %2261 = vmatpush1.msra.mxu0 0.0
        %2262 = vmatprep.subr.mxu0 0.0
        %2263 = vmatpush1.msra.mxu0 0.0
        %2264 = vmatprep.subr.mxu0 0.0
        %2265 = vmatpush1.msra.mxu0 0.0
        %2266 = vmatprep.subr.mxu0 0.0
        %2267 = vmatpush1.msra.mxu0 0.0
        %2268 = vmatprep.subr.mxu0 0.0
        %2269 = vmatpush1.msra.mxu0 0.0
        %2270 = vmatprep.subr.mxu0 0.0
        %2271 = vmatpush1.msra.mxu0 0.0
        %2272 = vmatprep.subr.mxu0 0.0
        %2273 = vmatpush1.msra.mxu0 0.0
        %2274 = vmatprep.mubr.f32.mxu0 0.0
        %2275 = vmatmul.mubr.f32.gmra.mrb[0].mxu0 %v2208
        %v2276 = vpop.f32.mrb[0].mxu0
        %v2277 = vadd.f32 %v746, %v2276
        %v2278 = vpop.f32.mrb[0].mxu0
        %2279 = vdwg.mxu0
        %vm2280 = vcmask 24576
        %2281 = vst.msk [vmem:[%s391] sm:$0x1] %vm2280, %v2277
        %s2282 = sand.u32 %s257, 1
        %s2283 = scalar_lea.sflag [#allocation3], %s2282
        %s2284 = sand.u32 %s257, 1
        %s2285 = scalar_lea.vmem [#allocation2], %s2284
        %s2286 = sand.u32 %s283, 1
        %s2287 = scalar_lea.sflag [#allocation5], %s2286
        %s2288 = sand.u32 %s283, 1
        %s2289 = smul.addr %s2288, 8
        %s2290 = scalar_lea.vmem [#allocation4], %s2289
        // Predicated region
        $region61: #{tpu_custom_call.1} parent=59 // pred_check
          %p2291 = pneg %p267
        $region62: #{tpu_custom_call.1} parent=59 // pred_check_branch
          %2293 = sbr.rel (%p2291) target = $region64
        $region63: #{tpu_custom_call.1} parent=59 // pred_region
          %s2295 = ssub.s32 16, 16
          %2296 = vsyncadd %s2283, %s2295
          %s2297 = smul.addr %s29, 16
          %s2298 = scalar_lea.hbm %s10, %s2297
          %s2300 = sshll.u32 %s2285, 4
          %s2301 = int_to_ptr.vmem [resolvable:$true] %s2300
          %2303 = dma.vmem_to_hbm [thread:$0]  %s2301, 16, %s2298, %s2283
        $region64: #{tpu_custom_call.1} parent=59 // pred_fallthru
          _
        // Predicated region
        $region65: #{tpu_custom_call.1} parent=59 // pred_check
          %p2304 = pneg %p293
        $region66: #{tpu_custom_call.1} parent=59 // pred_check_branch
          %2306 = sbr.rel (%p2304) target = $region68
        $region67: #{tpu_custom_call.1} parent=59 // pred_region
          %s2308 = ssub.s32 128, 128
          %2309 = vsyncadd %s2287, %s2308
          %s2310 = smul.addr %s29, 128
          %s2311 = scalar_lea.hbm %s11, %s2310
          %s2313 = sshll.u32 %s2290, 4
          %s2314 = int_to_ptr.vmem [resolvable:$true] %s2313
          %2316 = dma.vmem_to_hbm [thread:$0]  %s2314, 128, %s2311, %s2287
        $region68: #{tpu_custom_call.1} parent=59 // pred_fallthru
          _
      $region60: #{tpu_custom_call.1} parent=5 // pred_fallthru
        _
      %p2317 = scmp.le.s32.totalorder 2, %s24
      // Predicated region
      $region69: #{tpu_custom_call.1} parent=5 // pred_check
        %p2318 = pneg %p2317
      $region70: #{tpu_custom_call.1} parent=5 // pred_check_branch
        %2320 = sbr.rel (%p2318) target = $region72
      $region71: #{tpu_custom_call.1} parent=5 // pred_region
        %s2321 = ssub.s32 %s24, 2
        // Predicated region
        $region73: #{tpu_custom_call.1} parent=71 // pred_check
          %p2322 = pneg %p273
        $region74: #{tpu_custom_call.1} parent=71 // pred_check_branch
          %2324 = sbr.rel (%p2322) target = $region76
        $region75: #{tpu_custom_call.1} parent=71 // pred_region
          %s2325 = sand.u32 %s258, 1
          %s2326 = scalar_lea.sflag [#allocation3], %s2325
          %s2327 = sand.u32 %s258, 1
          %s2328 = scalar_lea.vmem [#allocation2], %s2327
          %2329 = dma.done %s2326, 16
        $region76: #{tpu_custom_call.1} parent=71 // pred_fallthru
          _
        // Predicated region
        $region77: #{tpu_custom_call.1} parent=71 // pred_check
          %p2330 = pneg %p299
        $region78: #{tpu_custom_call.1} parent=71 // pred_check_branch
          %2332 = sbr.rel (%p2330) target = $region80
        $region79: #{tpu_custom_call.1} parent=71 // pred_region
          %s2333 = sand.u32 %s284, 1
          %s2334 = scalar_lea.sflag [#allocation5], %s2333
          %s2335 = sand.u32 %s284, 1
          %s2336 = smul.addr %s2335, 8
          %s2337 = scalar_lea.vmem [#allocation4], %s2336
          %2338 = dma.done %s2334, 128
        $region80: #{tpu_custom_call.1} parent=71 // pred_fallthru
          _
      $region72: #{tpu_custom_call.1} parent=5 // pred_fallthru
        _
    $region6: #{tpu_custom_call.1} parent=1 // loop_footer
      %s28 = sadd.s32 1, %s24
    $region7: #{tpu_custom_call.1} parent=1 // loop_footer_branch
      %23 = sbr.rel target = $region3
    $region8: #{tpu_custom_call.1} parent=1 // loop_exit
      _
    %2339 = vsyncpa [#allocation3], 1
    %s2340 = scalar_lea.sflag [#allocation3], 1
    %2341 = vsyncpa %s2340, 1
    %2342 = vsyncpa [#allocation5], 1
    %s2343 = scalar_lea.sflag [#allocation5], 1
    %2344 = vsyncpa %s2343, 1

</llo_original>
